<compile_context>
chip_gen: v5e
topology: v5e:2x2
jax: 0.10.0
libtpu: 0.0.40
codegen_flags: <defaults>
</compile_context>

<pallas_src>
import functools

import jax
import jax.numpy as jnp
from jax.experimental import pallas as pl
from jax.experimental.pallas import tpu as pltpu

# ---------------- small "bert_config" ----------------
VOCAB = 100
MAX_POS = 16
TYPE_VOCAB = 2
HIDDEN = 32
N_HEADS = 2
HEAD_DIM = HIDDEN // N_HEADS
INTERMEDIATE = 64
N_LAYERS = 2
LN_EPS = 1e-12
NUM_GROUP_LABELS = 6
NUM_HATEFUL_LABELS = 2
HEAD_PAD = 128          # lane-dense padded width for the fused (group|hate) head
NEG_BIAS = -1e9         # large finite negative for masked positions (no -inf/NaN)

_VMEM = pl.BlockSpec(memory_space=pltpu.MemorySpace.VMEM)


def _layernorm(x, g, b):
    mean = jnp.mean(x, axis=-1, keepdims=True)
    var = jnp.mean(jnp.square(x - mean), axis=-1, keepdims=True)
    return (x - mean) * jax.lax.rsqrt(var + LN_EPS) * g + b


# ---------------- the fused encoder + pooler + heads kernel ----------------
def _fused_encoder_kernel(
    emb_ref,       # (B*S, H)
    mask_ref,      # (B*S, B*S) additive: 0 same-batch/unpadded, NEG_BIAS otherwise
    gvec_ref,      # (3, H): emb_ln_g | emb_ln_b | pool_b
    wqkv_ref,      # (L*NH*3, H, HEAD_DIM): per-head q/k/v projection weights
    bqkv_ref,      # (L*NH*3, 1, HEAD_DIM): per-head q/k/v projection biases
    wo_ref,        # (L*NH, HEAD_DIM, H): per-head row-block of the output proj
    lvec_ref,      # (L, 6, H): bo | ln1_g | ln1_b | b2 | ln2_g | ln2_b
    w1_ref, b1_ref, w2_ref,          # (L, H, I), (L, 1, I), (L, I, H)
    pool_w_ref,                      # (H, H)
    head_w_ref, head_b_ref,          # (H, 128), (1, 128)  [group|hate|zero-pad]
    logits_ref,                      # out: (B, 128)
    *, batch, seq):
    scale = 1.0 / (HEAD_DIM ** 0.5)

    gvec = gvec_ref[...]
    # embedding LayerNorm (no residual -> no zero tensor materialized)
    x = _layernorm(emb_ref[...], gvec[0:1, :], gvec[1:2, :])
    mask = mask_ref[...]

    for l in range(N_LAYERS):                    # static unroll: weights stay in VMEM
        lv = lvec_ref[l]                         # (6, H)

        # ---- self-attention: per-head dots over ALL B*S rows (block-diag mask) ----
        attn = None
        for h in range(N_HEADS):
            base = (l * N_HEADS + h) * 3
            q_h = (jnp.dot(x, wqkv_ref[base + 0], preferred_element_type=jnp.float32)
                   + bqkv_ref[base + 0])
            k_h = (jnp.dot(x, wqkv_ref[base + 1], preferred_element_type=jnp.float32)
                   + bqkv_ref[base + 1])
            v_h = (jnp.dot(x, wqkv_ref[base + 2], preferred_element_type=jnp.float32)
                   + bqkv_ref[base + 2])
            s = jax.lax.dot_general(
                q_h, k_h, (((1,), (1,)), ((), ())),
                preferred_element_type=jnp.float32) * scale + mask
            # explicit softmax: divide goes to the EUP via approximate reciprocal
            m = jnp.max(s, axis=-1, keepdims=True)
            p = jnp.exp(s - m)
            p = p * pl.reciprocal(jnp.sum(p, axis=-1, keepdims=True), approx=True)
            ctx = jnp.dot(p, v_h, preferred_element_type=jnp.float32)
            # concat(heads) @ wo == sum_h ctx_h @ wo[row-block h]
            contrib = jnp.dot(ctx, wo_ref[l * N_HEADS + h],
                              preferred_element_type=jnp.float32)
            attn = contrib if attn is None else attn + contrib
        attn = attn + lv[0:1, :]                 # bo added once (implicit broadcast)

        x = _layernorm(attn + x, lv[1:2, :], lv[2:3, :])

        # ---- feed-forward ----
        h1 = jnp.dot(x, w1_ref[l], preferred_element_type=jnp.float32) + b1_ref[l]
        # TODO(synk): HF BERT uses exact erf-GELU; tanh approximation kept for a
        # guaranteed Mosaic lowering.
        h1 = jax.nn.gelu(h1, approximate=True)
        h2 = jnp.dot(h1, w2_ref[l], preferred_element_type=jnp.float32) + lv[3:4, :]
        x = _layernorm(h2 + x, lv[4:5, :], lv[5:6, :])

    # ---- pooler (tanh on CLS rows) + fused lane-dense classification heads ----
    # CLS rows sit at sublane offsets b*seq (multiples of 8): sublane-aligned slices.
    cls = jnp.concatenate([x[b * seq:b * seq + 1, :] for b in range(batch)], axis=0)
    pooled = jnp.tanh(
        jnp.dot(cls, pool_w_ref[...], preferred_element_type=jnp.float32)
        + gvec[2:3, :])
    # dropout is the inference-mode identity
    logits_ref[...] = (
        jnp.dot(pooled, head_w_ref[...], preferred_element_type=jnp.float32)
        + head_b_ref[...])


# ---------------- parameter init (synthetic, deterministic) ----------------
def init_params(key):
    keys = iter(jax.random.split(key, 64))

    def w(shape, scale=0.02):
        return jax.random.normal(next(keys), shape, jnp.float32) * scale

    return {
        "word_emb": w((VOCAB, HIDDEN)),
        "pos_emb": w((MAX_POS, HIDDEN)),
        "type_emb": w((TYPE_VOCAB, HIDDEN)),
        "emb_ln_g": jnp.ones((HIDDEN,), jnp.float32),
        "emb_ln_b": jnp.zeros((HIDDEN,), jnp.float32),
        # per-layer weights stacked with a leading layer axis
        "wq": w((N_LAYERS, HIDDEN, HIDDEN)),
        "wk": w((N_LAYERS, HIDDEN, HIDDEN)),
        "wv": w((N_LAYERS, HIDDEN, HIDDEN)),
        "bq": jnp.zeros((N_LAYERS, HIDDEN), jnp.float32),
        "bk": jnp.zeros((N_LAYERS, HIDDEN), jnp.float32),
        "bv": jnp.zeros((N_LAYERS, HIDDEN), jnp.float32),
        "wo": w((N_LAYERS, HIDDEN, HIDDEN)),
        "bo": jnp.zeros((N_LAYERS, HIDDEN), jnp.float32),
        "ln1_g": jnp.ones((N_LAYERS, HIDDEN), jnp.float32),
        "ln1_b": jnp.zeros((N_LAYERS, HIDDEN), jnp.float32),
        "w1": w((N_LAYERS, HIDDEN, INTERMEDIATE)),
        "b1": jnp.zeros((N_LAYERS, INTERMEDIATE), jnp.float32),
        "w2": w((N_LAYERS, INTERMEDIATE, HIDDEN)),
        "b2": jnp.zeros((N_LAYERS, HIDDEN), jnp.float32),
        "ln2_g": jnp.ones((N_LAYERS, HIDDEN), jnp.float32),
        "ln2_b": jnp.zeros((N_LAYERS, HIDDEN), jnp.float32),
        "pool_w": w((HIDDEN, HIDDEN)),
        "pool_b": jnp.zeros((HIDDEN,), jnp.float32),
        "group_w": w((HIDDEN, NUM_GROUP_LABELS)),
        "group_b": jnp.zeros((NUM_GROUP_LABELS,), jnp.float32),
        "hate_w": w((HIDDEN, NUM_HATEFUL_LABELS)),
        "hate_b": jnp.zeros((NUM_HATEFUL_LABELS,), jnp.float32),
    }


# ---------------- forward pass ----------------
def cross_entropy(logits, labels):
    logz = jax.scipy.special.logsumexp(logits, axis=-1)
    ll = jnp.take_along_axis(logits, labels[:, None], axis=-1)[:, 0]
    return jnp.mean(logz - ll)


@jax.jit
def multi_task_forward(params, input_ids, attention_mask, group_labels, hateful_labels):
    B, S = input_ids.shape

    # embeddings (gather is XLA glue); everything else runs in ONE fused Pallas kernel
    # TODO(synk): token_type_ids hard-coded to type 0 (the reference call site passes none).
    emb = (
        jnp.take(params["word_emb"], input_ids, axis=0)
        + params["pos_emb"][:S][None, :, :]
        + params["type_emb"][0][None, None, :]
    ).reshape(B * S, HIDDEN)

    # block-diagonal + padding additive mask over all B*S rows (finite negative,
    # so a fully-masked row can't NaN)  -- HF-style large-negative mask behavior.
    batch_ids = jnp.repeat(jnp.arange(B), S)                               # (B*S,)
    key_pad = (1.0 - attention_mask.astype(jnp.float32).reshape(B * S)) * NEG_BIAS
    same_batch = batch_ids[:, None] == batch_ids[None, :]
    mask = jnp.where(same_batch, key_pad[None, :], NEG_BIAS)              # (B*S, B*S)

    # ---- pack weights: per-head splits + stacked bias/LN slabs (13 kernel inputs) ----
    def split_heads_w(w):   # (L, H, H) -> (L, NH, H, HEAD_DIM)
        return w.reshape(N_LAYERS, HIDDEN, N_HEADS, HEAD_DIM).transpose(0, 2, 1, 3)

    def split_heads_b(b):   # (L, H) -> (L, NH, HEAD_DIM)
        return b.reshape(N_LAYERS, N_HEADS, HEAD_DIM)

    wqkv = jnp.stack([split_heads_w(params["wq"]),
                      split_heads_w(params["wk"]),
                      split_heads_w(params["wv"])], axis=2)   # (L, NH, 3, H, HD)
    wqkv = wqkv.reshape(N_LAYERS * N_HEADS * 3, HIDDEN, HEAD_DIM)
    bqkv = jnp.stack([split_heads_b(params["bq"]),
                      split_heads_b(params["bk"]),
                      split_heads_b(params["bv"])], axis=2)   # (L, NH, 3, HD)
    bqkv = bqkv.reshape(N_LAYERS * N_HEADS * 3, 1, HEAD_DIM)
    wo = params["wo"].reshape(N_LAYERS, N_HEADS, HEAD_DIM, HIDDEN)
    wo = wo.reshape(N_LAYERS * N_HEADS, HEAD_DIM, HIDDEN)

    lvec = jnp.stack([params["bo"], params["ln1_g"], params["ln1_b"],
                      params["b2"], params["ln2_g"], params["ln2_b"]], axis=1)  # (L,6,H)
    gvec = jnp.stack([params["emb_ln_g"], params["emb_ln_b"], params["pool_b"]],
                     axis=0)                                                    # (3, H)
    b1 = params["b1"][:, None, :]                                               # (L,1,I)

    # fused (group|hate) classification head, zero-padded to a 128-lane slab
    ng, nh = NUM_GROUP_LABELS, NUM_HATEFUL_LABELS
    head_w = jnp.zeros((HIDDEN, HEAD_PAD), jnp.float32)
    head_w = head_w.at[:, :ng].set(params["group_w"])
    head_w = head_w.at[:, ng:ng + nh].set(params["hate_w"])
    head_b = jnp.zeros((1, HEAD_PAD), jnp.float32)
    head_b = head_b.at[:, :ng].set(params["group_b"][None, :])
    head_b = head_b.at[:, ng:ng + nh].set(params["hate_b"][None, :])

    logits = pl.pallas_call(
        functools.partial(_fused_encoder_kernel, batch=B, seq=S),
        out_shape=jax.ShapeDtypeStruct((B, HEAD_PAD), jnp.float32),
        in_specs=[_VMEM] * 13,
        out_specs=_VMEM,
    )(
        emb, mask, gvec,
        wqkv, bqkv, wo, lvec,
        params["w1"], b1, params["w2"],
        params["pool_w"], head_w, head_b,
    )

    group_logits = logits[:, :ng]
    hateful_logits = logits[:, ng:ng + nh]

    loss = cross_entropy(group_logits, group_labels) + cross_entropy(
        hateful_logits, hateful_labels
    )
    return {"loss": loss, "group_logits": group_logits, "hateful_logits": hateful_logits}


# ---------------- main ----------------
if __name__ == "__main__":
    key = jax.random.PRNGKey(0)
    k_par, k_ids, k_g, k_h = jax.random.split(key, 4)

    B, S = 2, 8
    params = init_params(k_par)

    input_ids = jax.random.randint(k_ids, (B, S), 0, VOCAB, dtype=jnp.int32)
    attention_mask = jnp.array(
        [[1, 1, 1, 1, 1, 1, 1, 1], [1, 1, 1, 1, 1, 1, 0, 0]], dtype=jnp.int32
    )
    group_labels = jax.random.randint(k_g, (B,), 0, NUM_GROUP_LABELS, dtype=jnp.int32)
    hateful_labels = jax.random.randint(k_h, (B,), 0, NUM_HATEFUL_LABELS, dtype=jnp.int32)

    out = multi_task_forward(params, input_ids, attention_mask, group_labels, hateful_labels)
    jax.block_until_ready(out)

    assert out["group_logits"].shape == (B, NUM_GROUP_LABELS)
    assert out["hateful_logits"].shape == (B, NUM_HATEFUL_LABELS)
    assert out["loss"].shape == ()
    assert bool(jnp.isfinite(out["loss"]))
    print("KERNEL_OK")
</pallas_src>

<mosaic_0001>
module attributes {stable_mosaic.version = 11 : i64} {
  func.func @_fused_encoder_kernel(%arg0: memref<16x32xf32, #tpu.memory_space<vmem>>, %arg1: memref<16x16xf32, #tpu.memory_space<vmem>>, %arg2: memref<3x32xf32, #tpu.memory_space<vmem>>, %arg3: memref<12x32x16xf32, #tpu.memory_space<vmem>>, %arg4: memref<12x1x16xf32, #tpu.memory_space<vmem>>, %arg5: memref<4x16x32xf32, #tpu.memory_space<vmem>>, %arg6: memref<2x6x32xf32, #tpu.memory_space<vmem>>, %arg7: memref<2x32x64xf32, #tpu.memory_space<vmem>>, %arg8: memref<2x1x64xf32, #tpu.memory_space<vmem>>, %arg9: memref<2x64x32xf32, #tpu.memory_space<vmem>>, %arg10: memref<32x32xf32, #tpu.memory_space<vmem>>, %arg11: memref<32x128xf32, #tpu.memory_space<vmem>>, %arg12: memref<1x128xf32, #tpu.memory_space<vmem>>, %arg13: memref<2x128xf32, #tpu.memory_space<vmem>>) attributes {dimension_semantics = [], scalar_prefetch = 0 : i64, scratch_operands = 0 : i64, tpu.core_type = #tpu.core_type<tc>} {
    %c0 = arith.constant 0 : index
    %c0_0 = arith.constant 0 : index
    %0 = vector.load %arg2[%c0, %c0_0] : memref<3x32xf32, #tpu.memory_space<vmem>>, vector<3x32xf32>
    %c0_1 = arith.constant 0 : index
    %c0_2 = arith.constant 0 : index
    %1 = vector.load %arg0[%c0_1, %c0_2] : memref<16x32xf32, #tpu.memory_space<vmem>>, vector<16x32xf32>
    %2 = vector.extract_strided_slice %0 {offsets = [0, 0], sizes = [1, 32], strides = [1, 1]} : vector<3x32xf32> to vector<1x32xf32>
    %3 = vector.extract_strided_slice %0 {offsets = [1, 0], sizes = [1, 32], strides = [1, 1]} : vector<3x32xf32> to vector<1x32xf32>
    %cst = arith.constant dense<0.000000e+00> : vector<16xf32>
    %4 = vector.multi_reduction <add>, %1, %cst [1] : vector<16x32xf32> to vector<16xf32>
    %5 = vector.shape_cast %4 : vector<16xf32> to vector<16x1xf32>
    %cst_3 = arith.constant 3.200000e+01 : f32
    %6 = vector.broadcast %cst_3 : f32 to vector<16x1xf32>
    %7 = arith.divf %5, %6 : vector<16x1xf32>
    %8 = vector.broadcast %7 : vector<16x1xf32> to vector<16x32xf32>
    %9 = arith.subf %1, %8 : vector<16x32xf32>
    %10 = arith.mulf %9, %9 : vector<16x32xf32>
    %cst_4 = arith.constant dense<0.000000e+00> : vector<16xf32>
    %11 = vector.multi_reduction <add>, %10, %cst_4 [1] : vector<16x32xf32> to vector<16xf32>
    %12 = vector.shape_cast %11 : vector<16xf32> to vector<16x1xf32>
    %cst_5 = arith.constant 3.200000e+01 : f32
    %13 = vector.broadcast %cst_5 : f32 to vector<16x1xf32>
    %14 = arith.divf %12, %13 : vector<16x1xf32>
    %15 = vector.broadcast %7 : vector<16x1xf32> to vector<16x32xf32>
    %16 = arith.subf %1, %15 : vector<16x32xf32>
    %cst_6 = arith.constant 9.99999996E-13 : f32
    %17 = vector.broadcast %cst_6 : f32 to vector<16x1xf32>
    %18 = arith.addf %14, %17 : vector<16x1xf32>
    %19 = math.rsqrt %18 : vector<16x1xf32>
    %20 = vector.broadcast %19 : vector<16x1xf32> to vector<16x32xf32>
    %21 = arith.mulf %16, %20 : vector<16x32xf32>
    %22 = vector.broadcast %2 : vector<1x32xf32> to vector<16x32xf32>
    %23 = arith.mulf %21, %22 : vector<16x32xf32>
    %24 = vector.broadcast %3 : vector<1x32xf32> to vector<16x32xf32>
    %25 = arith.addf %23, %24 : vector<16x32xf32>
    %c0_7 = arith.constant 0 : index
    %c0_8 = arith.constant 0 : index
    %26 = vector.load %arg1[%c0_7, %c0_8] : memref<16x16xf32, #tpu.memory_space<vmem>>, vector<16x16xf32>
    %c0_9 = arith.constant 0 : index
    %c0_10 = arith.constant 0 : index
    %c0_11 = arith.constant 0 : index
    %27 = vector.load %arg6[%c0_9, %c0_10, %c0_11] : memref<2x6x32xf32, #tpu.memory_space<vmem>>, vector<1x6x32xf32>
    %28 = vector.shape_cast %27 : vector<1x6x32xf32> to vector<6x32xf32>
    %c0_12 = arith.constant 0 : index
    %c0_13 = arith.constant 0 : index
    %c0_14 = arith.constant 0 : index
    %29 = vector.load %arg3[%c0_12, %c0_13, %c0_14] : memref<12x32x16xf32, #tpu.memory_space<vmem>>, vector<1x32x16xf32>
    %30 = vector.shape_cast %29 : vector<1x32x16xf32> to vector<32x16xf32>
    %cst_15 = arith.constant dense<0.000000e+00> : vector<16x16xf32>
    %31 = tpu.matmul %25, %30, %cst_15 {dimension_numbers = #tpu.dot_dimension_numbers<[1], [0], [0], [1], [0, 0, 1, 1], [], []>} : vector<16x32xf32>, vector<32x16xf32>, vector<16x16xf32> -> vector<16x16xf32>
    %c0_16 = arith.constant 0 : index
    %c0_17 = arith.constant 0 : index
    %c0_18 = arith.constant 0 : index
    %32 = vector.load %arg4[%c0_16, %c0_17, %c0_18] : memref<12x1x16xf32, #tpu.memory_space<vmem>>, vector<1x1x16xf32>
    %33 = vector.shape_cast %32 : vector<1x1x16xf32> to vector<1x16xf32>
    %34 = vector.broadcast %33 : vector<1x16xf32> to vector<16x16xf32>
    %35 = arith.addf %31, %34 : vector<16x16xf32>
    %c1 = arith.constant 1 : index
    %c0_19 = arith.constant 0 : index
    %c0_20 = arith.constant 0 : index
    %36 = vector.load %arg3[%c1, %c0_19, %c0_20] : memref<12x32x16xf32, #tpu.memory_space<vmem>>, vector<1x32x16xf32>
    %37 = vector.shape_cast %36 : vector<1x32x16xf32> to vector<32x16xf32>
    %cst_21 = arith.constant dense<0.000000e+00> : vector<16x16xf32>
    %38 = tpu.matmul %25, %37, %cst_21 {dimension_numbers = #tpu.dot_dimension_numbers<[1], [0], [0], [1], [0, 0, 1, 1], [], []>} : vector<16x32xf32>, vector<32x16xf32>, vector<16x16xf32> -> vector<16x16xf32>
    %c1_22 = arith.constant 1 : index
    %c0_23 = arith.constant 0 : index
    %c0_24 = arith.constant 0 : index
    %39 = vector.load %arg4[%c1_22, %c0_23, %c0_24] : memref<12x1x16xf32, #tpu.memory_space<vmem>>, vector<1x1x16xf32>
    %40 = vector.shape_cast %39 : vector<1x1x16xf32> to vector<1x16xf32>
    %41 = vector.broadcast %40 : vector<1x16xf32> to vector<16x16xf32>
    %42 = arith.addf %38, %41 : vector<16x16xf32>
    %c2 = arith.constant 2 : index
    %c0_25 = arith.constant 0 : index
    %c0_26 = arith.constant 0 : index
    %43 = vector.load %arg3[%c2, %c0_25, %c0_26] : memref<12x32x16xf32, #tpu.memory_space<vmem>>, vector<1x32x16xf32>
    %44 = vector.shape_cast %43 : vector<1x32x16xf32> to vector<32x16xf32>
    %cst_27 = arith.constant dense<0.000000e+00> : vector<16x16xf32>
    %45 = tpu.matmul %25, %44, %cst_27 {dimension_numbers = #tpu.dot_dimension_numbers<[1], [0], [0], [1], [0, 0, 1, 1], [], []>} : vector<16x32xf32>, vector<32x16xf32>, vector<16x16xf32> -> vector<16x16xf32>
    %c2_28 = arith.constant 2 : index
    %c0_29 = arith.constant 0 : index
    %c0_30 = arith.constant 0 : index
    %46 = vector.load %arg4[%c2_28, %c0_29, %c0_30] : memref<12x1x16xf32, #tpu.memory_space<vmem>>, vector<1x1x16xf32>
    %47 = vector.shape_cast %46 : vector<1x1x16xf32> to vector<1x16xf32>
    %48 = vector.broadcast %47 : vector<1x16xf32> to vector<16x16xf32>
    %49 = arith.addf %45, %48 : vector<16x16xf32>
    %cst_31 = arith.constant dense<0.000000e+00> : vector<16x16xf32>
    %50 = tpu.matmul %35, %42, %cst_31 {dimension_numbers = #tpu.dot_dimension_numbers<[1], [1], [0], [0], [0, 0, 1, 0], [], []>} : vector<16x16xf32>, vector<16x16xf32>, vector<16x16xf32> -> vector<16x16xf32>
    %cst_32 = arith.constant 2.500000e-01 : f32
    %51 = vector.broadcast %cst_32 : f32 to vector<16x16xf32>
    %52 = arith.mulf %50, %51 : vector<16x16xf32>
    %53 = arith.addf %52, %26 : vector<16x16xf32>
    %cst_33 = arith.constant dense<0xFF800000> : vector<16xf32>
    %54 = vector.multi_reduction <maximumf>, %53, %cst_33 [1] : vector<16x16xf32> to vector<16xf32>
    %55 = vector.shape_cast %54 : vector<16xf32> to vector<16x1xf32>
    %56 = vector.broadcast %55 : vector<16x1xf32> to vector<16x16xf32>
    %57 = arith.subf %53, %56 : vector<16x16xf32>
    %58 = math.exp %57 : vector<16x16xf32>
    %cst_34 = arith.constant dense<0.000000e+00> : vector<16xf32>
    %59 = vector.multi_reduction <add>, %58, %cst_34 [1] : vector<16x16xf32> to vector<16xf32>
    %60 = vector.shape_cast %59 : vector<16xf32> to vector<16x1xf32>
    %61 = tpu.reciprocal %60 {approx = true} : vector<16x1xf32> -> vector<16x1xf32>
    %62 = vector.broadcast %61 : vector<16x1xf32> to vector<16x16xf32>
    %63 = arith.mulf %58, %62 : vector<16x16xf32>
    %cst_35 = arith.constant dense<0.000000e+00> : vector<16x16xf32>
    %64 = tpu.matmul %63, %49, %cst_35 {dimension_numbers = #tpu.dot_dimension_numbers<[1], [0], [0], [1], [0, 0, 1, 1], [], []>} : vector<16x16xf32>, vector<16x16xf32>, vector<16x16xf32> -> vector<16x16xf32>
    %c0_36 = arith.constant 0 : index
    %c0_37 = arith.constant 0 : index
    %c0_38 = arith.constant 0 : index
    %65 = vector.load %arg5[%c0_36, %c0_37, %c0_38] : memref<4x16x32xf32, #tpu.memory_space<vmem>>, vector<1x16x32xf32>
    %66 = vector.shape_cast %65 : vector<1x16x32xf32> to vector<16x32xf32>
    %cst_39 = arith.constant dense<0.000000e+00> : vector<16x32xf32>
    %67 = tpu.matmul %64, %66, %cst_39 {dimension_numbers = #tpu.dot_dimension_numbers<[1], [0], [0], [1], [0, 0, 1, 1], [], []>} : vector<16x16xf32>, vector<16x32xf32>, vector<16x32xf32> -> vector<16x32xf32>
    %c3 = arith.constant 3 : index
    %c0_40 = arith.constant 0 : index
    %c0_41 = arith.constant 0 : index
    %68 = vector.load %arg3[%c3, %c0_40, %c0_41] : memref<12x32x16xf32, #tpu.memory_space<vmem>>, vector<1x32x16xf32>
    %69 = vector.shape_cast %68 : vector<1x32x16xf32> to vector<32x16xf32>
    %cst_42 = arith.constant dense<0.000000e+00> : vector<16x16xf32>
    %70 = tpu.matmul %25, %69, %cst_42 {dimension_numbers = #tpu.dot_dimension_numbers<[1], [0], [0], [1], [0, 0, 1, 1], [], []>} : vector<16x32xf32>, vector<32x16xf32>, vector<16x16xf32> -> vector<16x16xf32>
    %c3_43 = arith.constant 3 : index
    %c0_44 = arith.constant 0 : index
    %c0_45 = arith.constant 0 : index
    %71 = vector.load %arg4[%c3_43, %c0_44, %c0_45] : memref<12x1x16xf32, #tpu.memory_space<vmem>>, vector<1x1x16xf32>
    %72 = vector.shape_cast %71 : vector<1x1x16xf32> to vector<1x16xf32>
    %73 = vector.broadcast %72 : vector<1x16xf32> to vector<16x16xf32>
    %74 = arith.addf %70, %73 : vector<16x16xf32>
    %c4 = arith.constant 4 : index
    %c0_46 = arith.constant 0 : index
    %c0_47 = arith.constant 0 : index
    %75 = vector.load %arg3[%c4, %c0_46, %c0_47] : memref<12x32x16xf32, #tpu.memory_space<vmem>>, vector<1x32x16xf32>
    %76 = vector.shape_cast %75 : vector<1x32x16xf32> to vector<32x16xf32>
    %cst_48 = arith.constant dense<0.000000e+00> : vector<16x16xf32>
    %77 = tpu.matmul %25, %76, %cst_48 {dimension_numbers = #tpu.dot_dimension_numbers<[1], [0], [0], [1], [0, 0, 1, 1], [], []>} : vector<16x32xf32>, vector<32x16xf32>, vector<16x16xf32> -> vector<16x16xf32>
    %c4_49 = arith.constant 4 : index
    %c0_50 = arith.constant 0 : index
    %c0_51 = arith.constant 0 : index
    %78 = vector.load %arg4[%c4_49, %c0_50, %c0_51] : memref<12x1x16xf32, #tpu.memory_space<vmem>>, vector<1x1x16xf32>
    %79 = vector.shape_cast %78 : vector<1x1x16xf32> to vector<1x16xf32>
    %80 = vector.broadcast %79 : vector<1x16xf32> to vector<16x16xf32>
    %81 = arith.addf %77, %80 : vector<16x16xf32>
    %c5 = arith.constant 5 : index
    %c0_52 = arith.constant 0 : index
    %c0_53 = arith.constant 0 : index
    %82 = vector.load %arg3[%c5, %c0_52, %c0_53] : memref<12x32x16xf32, #tpu.memory_space<vmem>>, vector<1x32x16xf32>
    %83 = vector.shape_cast %82 : vector<1x32x16xf32> to vector<32x16xf32>
    %cst_54 = arith.constant dense<0.000000e+00> : vector<16x16xf32>
    %84 = tpu.matmul %25, %83, %cst_54 {dimension_numbers = #tpu.dot_dimension_numbers<[1], [0], [0], [1], [0, 0, 1, 1], [], []>} : vector<16x32xf32>, vector<32x16xf32>, vector<16x16xf32> -> vector<16x16xf32>
    %c5_55 = arith.constant 5 : index
    %c0_56 = arith.constant 0 : index
    %c0_57 = arith.constant 0 : index
    %85 = vector.load %arg4[%c5_55, %c0_56, %c0_57] : memref<12x1x16xf32, #tpu.memory_space<vmem>>, vector<1x1x16xf32>
    %86 = vector.shape_cast %85 : vector<1x1x16xf32> to vector<1x16xf32>
    %87 = vector.broadcast %86 : vector<1x16xf32> to vector<16x16xf32>
    %88 = arith.addf %84, %87 : vector<16x16xf32>
    %cst_58 = arith.constant dense<0.000000e+00> : vector<16x16xf32>
    %89 = tpu.matmul %74, %81, %cst_58 {dimension_numbers = #tpu.dot_dimension_numbers<[1], [1], [0], [0], [0, 0, 1, 0], [], []>} : vector<16x16xf32>, vector<16x16xf32>, vector<16x16xf32> -> vector<16x16xf32>
    %cst_59 = arith.constant 2.500000e-01 : f32
    %90 = vector.broadcast %cst_59 : f32 to vector<16x16xf32>
    %91 = arith.mulf %89, %90 : vector<16x16xf32>
    %92 = arith.addf %91, %26 : vector<16x16xf32>
    %cst_60 = arith.constant dense<0xFF800000> : vector<16xf32>
    %93 = vector.multi_reduction <maximumf>, %92, %cst_60 [1] : vector<16x16xf32> to vector<16xf32>
    %94 = vector.shape_cast %93 : vector<16xf32> to vector<16x1xf32>
    %95 = vector.broadcast %94 : vector<16x1xf32> to vector<16x16xf32>
    %96 = arith.subf %92, %95 : vector<16x16xf32>
    %97 = math.exp %96 : vector<16x16xf32>
    %cst_61 = arith.constant dense<0.000000e+00> : vector<16xf32>
    %98 = vector.multi_reduction <add>, %97, %cst_61 [1] : vector<16x16xf32> to vector<16xf32>
    %99 = vector.shape_cast %98 : vector<16xf32> to vector<16x1xf32>
    %100 = tpu.reciprocal %99 {approx = true} : vector<16x1xf32> -> vector<16x1xf32>
    %101 = vector.broadcast %100 : vector<16x1xf32> to vector<16x16xf32>
    %102 = arith.mulf %97, %101 : vector<16x16xf32>
    %cst_62 = arith.constant dense<0.000000e+00> : vector<16x16xf32>
    %103 = tpu.matmul %102, %88, %cst_62 {dimension_numbers = #tpu.dot_dimension_numbers<[1], [0], [0], [1], [0, 0, 1, 1], [], []>} : vector<16x16xf32>, vector<16x16xf32>, vector<16x16xf32> -> vector<16x16xf32>
    %c1_63 = arith.constant 1 : index
    %c0_64 = arith.constant 0 : index
    %c0_65 = arith.constant 0 : index
    %104 = vector.load %arg5[%c1_63, %c0_64, %c0_65] : memref<4x16x32xf32, #tpu.memory_space<vmem>>, vector<1x16x32xf32>
    %105 = vector.shape_cast %104 : vector<1x16x32xf32> to vector<16x32xf32>
    %cst_66 = arith.constant dense<0.000000e+00> : vector<16x32xf32>
    %106 = tpu.matmul %103, %105, %cst_66 {dimension_numbers = #tpu.dot_dimension_numbers<[1], [0], [0], [1], [0, 0, 1, 1], [], []>} : vector<16x16xf32>, vector<16x32xf32>, vector<16x32xf32> -> vector<16x32xf32>
    %107 = arith.addf %67, %106 : vector<16x32xf32>
    %108 = vector.extract_strided_slice %28 {offsets = [0, 0], sizes = [1, 32], strides = [1, 1]} : vector<6x32xf32> to vector<1x32xf32>
    %109 = vector.broadcast %108 : vector<1x32xf32> to vector<16x32xf32>
    %110 = arith.addf %107, %109 : vector<16x32xf32>
    %111 = arith.addf %110, %25 : vector<16x32xf32>
    %112 = vector.extract_strided_slice %28 {offsets = [1, 0], sizes = [1, 32], strides = [1, 1]} : vector<6x32xf32> to vector<1x32xf32>
    %113 = vector.extract_strided_slice %28 {offsets = [2, 0], sizes = [1, 32], strides = [1, 1]} : vector<6x32xf32> to vector<1x32xf32>
    %cst_67 = arith.constant dense<0.000000e+00> : vector<16xf32>
    %114 = vector.multi_reduction <add>, %111, %cst_67 [1] : vector<16x32xf32> to vector<16xf32>
    %115 = vector.shape_cast %114 : vector<16xf32> to vector<16x1xf32>
    %cst_68 = arith.constant 3.200000e+01 : f32
    %116 = vector.broadcast %cst_68 : f32 to vector<16x1xf32>
    %117 = arith.divf %115, %116 : vector<16x1xf32>
    %118 = vector.broadcast %117 : vector<16x1xf32> to vector<16x32xf32>
    %119 = arith.subf %111, %118 : vector<16x32xf32>
    %120 = arith.mulf %119, %119 : vector<16x32xf32>
    %cst_69 = arith.constant dense<0.000000e+00> : vector<16xf32>
    %121 = vector.multi_reduction <add>, %120, %cst_69 [1] : vector<16x32xf32> to vector<16xf32>
    %122 = vector.shape_cast %121 : vector<16xf32> to vector<16x1xf32>
    %cst_70 = arith.constant 3.200000e+01 : f32
    %123 = vector.broadcast %cst_70 : f32 to vector<16x1xf32>
    %124 = arith.divf %122, %123 : vector<16x1xf32>
    %125 = vector.broadcast %117 : vector<16x1xf32> to vector<16x32xf32>
    %126 = arith.subf %111, %125 : vector<16x32xf32>
    %cst_71 = arith.constant 9.99999996E-13 : f32
    %127 = vector.broadcast %cst_71 : f32 to vector<16x1xf32>
    %128 = arith.addf %124, %127 : vector<16x1xf32>
    %129 = math.rsqrt %128 : vector<16x1xf32>
    %130 = vector.broadcast %129 : vector<16x1xf32> to vector<16x32xf32>
    %131 = arith.mulf %126, %130 : vector<16x32xf32>
    %132 = vector.broadcast %112 : vector<1x32xf32> to vector<16x32xf32>
    %133 = arith.mulf %131, %132 : vector<16x32xf32>
    %134 = vector.broadcast %113 : vector<1x32xf32> to vector<16x32xf32>
    %135 = arith.addf %133, %134 : vector<16x32xf32>
    %c0_72 = arith.constant 0 : index
    %c0_73 = arith.constant 0 : index
    %c0_74 = arith.constant 0 : index
    %136 = vector.load %arg7[%c0_72, %c0_73, %c0_74] : memref<2x32x64xf32, #tpu.memory_space<vmem>>, vector<1x32x64xf32>
    %137 = vector.shape_cast %136 : vector<1x32x64xf32> to vector<32x64xf32>
    %cst_75 = arith.constant dense<0.000000e+00> : vector<16x64xf32>
    %138 = tpu.matmul %135, %137, %cst_75 {dimension_numbers = #tpu.dot_dimension_numbers<[1], [0], [0], [1], [0, 0, 1, 1], [], []>} : vector<16x32xf32>, vector<32x64xf32>, vector<16x64xf32> -> vector<16x64xf32>
    %c0_76 = arith.constant 0 : index
    %c0_77 = arith.constant 0 : index
    %c0_78 = arith.constant 0 : index
    %139 = vector.load %arg8[%c0_76, %c0_77, %c0_78] : memref<2x1x64xf32, #tpu.memory_space<vmem>>, vector<1x1x64xf32>
    %140 = vector.shape_cast %139 : vector<1x1x64xf32> to vector<1x64xf32>
    %141 = vector.broadcast %140 : vector<1x64xf32> to vector<16x64xf32>
    %142 = arith.addf %138, %141 : vector<16x64xf32>
    %143 = arith.mulf %142, %142 : vector<16x64xf32>
    %144 = arith.mulf %142, %143 : vector<16x64xf32>
    %cst_79 = arith.constant 4.471500e-02 : f32
    %145 = vector.broadcast %cst_79 : f32 to vector<16x64xf32>
    %146 = arith.mulf %145, %144 : vector<16x64xf32>
    %147 = arith.addf %142, %146 : vector<16x64xf32>
    %cst_80 = arith.constant 0.797884583 : f32
    %148 = vector.broadcast %cst_80 : f32 to vector<16x64xf32>
    %149 = arith.mulf %148, %147 : vector<16x64xf32>
    %150 = math.tanh %149 : vector<16x64xf32>
    %cst_81 = arith.constant 1.000000e+00 : f32
    %151 = vector.broadcast %cst_81 : f32 to vector<16x64xf32>
    %152 = arith.addf %151, %150 : vector<16x64xf32>
    %cst_82 = arith.constant 5.000000e-01 : f32
    %153 = vector.broadcast %cst_82 : f32 to vector<16x64xf32>
    %154 = arith.mulf %153, %152 : vector<16x64xf32>
    %155 = arith.mulf %142, %154 : vector<16x64xf32>
    %c0_83 = arith.constant 0 : index
    %c0_84 = arith.constant 0 : index
    %c0_85 = arith.constant 0 : index
    %156 = vector.load %arg9[%c0_83, %c0_84, %c0_85] : memref<2x64x32xf32, #tpu.memory_space<vmem>>, vector<1x64x32xf32>
    %157 = vector.shape_cast %156 : vector<1x64x32xf32> to vector<64x32xf32>
    %cst_86 = arith.constant dense<0.000000e+00> : vector<16x32xf32>
    %158 = tpu.matmul %155, %157, %cst_86 {dimension_numbers = #tpu.dot_dimension_numbers<[1], [0], [0], [1], [0, 0, 1, 1], [], []>} : vector<16x64xf32>, vector<64x32xf32>, vector<16x32xf32> -> vector<16x32xf32>
    %159 = vector.extract_strided_slice %28 {offsets = [3, 0], sizes = [1, 32], strides = [1, 1]} : vector<6x32xf32> to vector<1x32xf32>
    %160 = vector.broadcast %159 : vector<1x32xf32> to vector<16x32xf32>
    %161 = arith.addf %158, %160 : vector<16x32xf32>
    %162 = arith.addf %161, %135 : vector<16x32xf32>
    %163 = vector.extract_strided_slice %28 {offsets = [4, 0], sizes = [1, 32], strides = [1, 1]} : vector<6x32xf32> to vector<1x32xf32>
    %164 = vector.extract_strided_slice %28 {offsets = [5, 0], sizes = [1, 32], strides = [1, 1]} : vector<6x32xf32> to vector<1x32xf32>
    %cst_87 = arith.constant dense<0.000000e+00> : vector<16xf32>
    %165 = vector.multi_reduction <add>, %162, %cst_87 [1] : vector<16x32xf32> to vector<16xf32>
    %166 = vector.shape_cast %165 : vector<16xf32> to vector<16x1xf32>
    %cst_88 = arith.constant 3.200000e+01 : f32
    %167 = vector.broadcast %cst_88 : f32 to vector<16x1xf32>
    %168 = arith.divf %166, %167 : vector<16x1xf32>
    %169 = vector.broadcast %168 : vector<16x1xf32> to vector<16x32xf32>
    %170 = arith.subf %162, %169 : vector<16x32xf32>
    %171 = arith.mulf %170, %170 : vector<16x32xf32>
    %cst_89 = arith.constant dense<0.000000e+00> : vector<16xf32>
    %172 = vector.multi_reduction <add>, %171, %cst_89 [1] : vector<16x32xf32> to vector<16xf32>
    %173 = vector.shape_cast %172 : vector<16xf32> to vector<16x1xf32>
    %cst_90 = arith.constant 3.200000e+01 : f32
    %174 = vector.broadcast %cst_90 : f32 to vector<16x1xf32>
    %175 = arith.divf %173, %174 : vector<16x1xf32>
    %176 = vector.broadcast %168 : vector<16x1xf32> to vector<16x32xf32>
    %177 = arith.subf %162, %176 : vector<16x32xf32>
    %cst_91 = arith.constant 9.99999996E-13 : f32
    %178 = vector.broadcast %cst_91 : f32 to vector<16x1xf32>
    %179 = arith.addf %175, %178 : vector<16x1xf32>
    %180 = math.rsqrt %179 : vector<16x1xf32>
    %181 = vector.broadcast %180 : vector<16x1xf32> to vector<16x32xf32>
    %182 = arith.mulf %177, %181 : vector<16x32xf32>
    %183 = vector.broadcast %163 : vector<1x32xf32> to vector<16x32xf32>
    %184 = arith.mulf %182, %183 : vector<16x32xf32>
    %185 = vector.broadcast %164 : vector<1x32xf32> to vector<16x32xf32>
    %186 = arith.addf %184, %185 : vector<16x32xf32>
    %c1_92 = arith.constant 1 : index
    %c0_93 = arith.constant 0 : index
    %c0_94 = arith.constant 0 : index
    %187 = vector.load %arg6[%c1_92, %c0_93, %c0_94] : memref<2x6x32xf32, #tpu.memory_space<vmem>>, vector<1x6x32xf32>
    %188 = vector.shape_cast %187 : vector<1x6x32xf32> to vector<6x32xf32>
    %c6 = arith.constant 6 : index
    %c0_95 = arith.constant 0 : index
    %c0_96 = arith.constant 0 : index
    %189 = vector.load %arg3[%c6, %c0_95, %c0_96] : memref<12x32x16xf32, #tpu.memory_space<vmem>>, vector<1x32x16xf32>
    %190 = vector.shape_cast %189 : vector<1x32x16xf32> to vector<32x16xf32>
    %cst_97 = arith.constant dense<0.000000e+00> : vector<16x16xf32>
    %191 = tpu.matmul %186, %190, %cst_97 {dimension_numbers = #tpu.dot_dimension_numbers<[1], [0], [0], [1], [0, 0, 1, 1], [], []>} : vector<16x32xf32>, vector<32x16xf32>, vector<16x16xf32> -> vector<16x16xf32>
    %c6_98 = arith.constant 6 : index
    %c0_99 = arith.constant 0 : index
    %c0_100 = arith.constant 0 : index
    %192 = vector.load %arg4[%c6_98, %c0_99, %c0_100] : memref<12x1x16xf32, #tpu.memory_space<vmem>>, vector<1x1x16xf32>
    %193 = vector.shape_cast %192 : vector<1x1x16xf32> to vector<1x16xf32>
    %194 = vector.broadcast %193 : vector<1x16xf32> to vector<16x16xf32>
    %195 = arith.addf %191, %194 : vector<16x16xf32>
    %c7 = arith.constant 7 : index
    %c0_101 = arith.constant 0 : index
    %c0_102 = arith.constant 0 : index
    %196 = vector.load %arg3[%c7, %c0_101, %c0_102] : memref<12x32x16xf32, #tpu.memory_space<vmem>>, vector<1x32x16xf32>
    %197 = vector.shape_cast %196 : vector<1x32x16xf32> to vector<32x16xf32>
    %cst_103 = arith.constant dense<0.000000e+00> : vector<16x16xf32>
    %198 = tpu.matmul %186, %197, %cst_103 {dimension_numbers = #tpu.dot_dimension_numbers<[1], [0], [0], [1], [0, 0, 1, 1], [], []>} : vector<16x32xf32>, vector<32x16xf32>, vector<16x16xf32> -> vector<16x16xf32>
    %c7_104 = arith.constant 7 : index
    %c0_105 = arith.constant 0 : index
    %c0_106 = arith.constant 0 : index
    %199 = vector.load %arg4[%c7_104, %c0_105, %c0_106] : memref<12x1x16xf32, #tpu.memory_space<vmem>>, vector<1x1x16xf32>
    %200 = vector.shape_cast %199 : vector<1x1x16xf32> to vector<1x16xf32>
    %201 = vector.broadcast %200 : vector<1x16xf32> to vector<16x16xf32>
    %202 = arith.addf %198, %201 : vector<16x16xf32>
    %c8 = arith.constant 8 : index
    %c0_107 = arith.constant 0 : index
    %c0_108 = arith.constant 0 : index
    %203 = vector.load %arg3[%c8, %c0_107, %c0_108] : memref<12x32x16xf32, #tpu.memory_space<vmem>>, vector<1x32x16xf32>
    %204 = vector.shape_cast %203 : vector<1x32x16xf32> to vector<32x16xf32>
    %cst_109 = arith.constant dense<0.000000e+00> : vector<16x16xf32>
    %205 = tpu.matmul %186, %204, %cst_109 {dimension_numbers = #tpu.dot_dimension_numbers<[1], [0], [0], [1], [0, 0, 1, 1], [], []>} : vector<16x32xf32>, vector<32x16xf32>, vector<16x16xf32> -> vector<16x16xf32>
    %c8_110 = arith.constant 8 : index
    %c0_111 = arith.constant 0 : index
    %c0_112 = arith.constant 0 : index
    %206 = vector.load %arg4[%c8_110, %c0_111, %c0_112] : memref<12x1x16xf32, #tpu.memory_space<vmem>>, vector<1x1x16xf32>
    %207 = vector.shape_cast %206 : vector<1x1x16xf32> to vector<1x16xf32>
    %208 = vector.broadcast %207 : vector<1x16xf32> to vector<16x16xf32>
    %209 = arith.addf %205, %208 : vector<16x16xf32>
    %cst_113 = arith.constant dense<0.000000e+00> : vector<16x16xf32>
    %210 = tpu.matmul %195, %202, %cst_113 {dimension_numbers = #tpu.dot_dimension_numbers<[1], [1], [0], [0], [0, 0, 1, 0], [], []>} : vector<16x16xf32>, vector<16x16xf32>, vector<16x16xf32> -> vector<16x16xf32>
    %cst_114 = arith.constant 2.500000e-01 : f32
    %211 = vector.broadcast %cst_114 : f32 to vector<16x16xf32>
    %212 = arith.mulf %210, %211 : vector<16x16xf32>
    %213 = arith.addf %212, %26 : vector<16x16xf32>
    %cst_115 = arith.constant dense<0xFF800000> : vector<16xf32>
    %214 = vector.multi_reduction <maximumf>, %213, %cst_115 [1] : vector<16x16xf32> to vector<16xf32>
    %215 = vector.shape_cast %214 : vector<16xf32> to vector<16x1xf32>
    %216 = vector.broadcast %215 : vector<16x1xf32> to vector<16x16xf32>
    %217 = arith.subf %213, %216 : vector<16x16xf32>
    %218 = math.exp %217 : vector<16x16xf32>
    %cst_116 = arith.constant dense<0.000000e+00> : vector<16xf32>
    %219 = vector.multi_reduction <add>, %218, %cst_116 [1] : vector<16x16xf32> to vector<16xf32>
    %220 = vector.shape_cast %219 : vector<16xf32> to vector<16x1xf32>
    %221 = tpu.reciprocal %220 {approx = true} : vector<16x1xf32> -> vector<16x1xf32>
    %222 = vector.broadcast %221 : vector<16x1xf32> to vector<16x16xf32>
    %223 = arith.mulf %218, %222 : vector<16x16xf32>
    %cst_117 = arith.constant dense<0.000000e+00> : vector<16x16xf32>
    %224 = tpu.matmul %223, %209, %cst_117 {dimension_numbers = #tpu.dot_dimension_numbers<[1], [0], [0], [1], [0, 0, 1, 1], [], []>} : vector<16x16xf32>, vector<16x16xf32>, vector<16x16xf32> -> vector<16x16xf32>
    %c2_118 = arith.constant 2 : index
    %c0_119 = arith.constant 0 : index
    %c0_120 = arith.constant 0 : index
    %225 = vector.load %arg5[%c2_118, %c0_119, %c0_120] : memref<4x16x32xf32, #tpu.memory_space<vmem>>, vector<1x16x32xf32>
    %226 = vector.shape_cast %225 : vector<1x16x32xf32> to vector<16x32xf32>
    %cst_121 = arith.constant dense<0.000000e+00> : vector<16x32xf32>
    %227 = tpu.matmul %224, %226, %cst_121 {dimension_numbers = #tpu.dot_dimension_numbers<[1], [0], [0], [1], [0, 0, 1, 1], [], []>} : vector<16x16xf32>, vector<16x32xf32>, vector<16x32xf32> -> vector<16x32xf32>
    %c9 = arith.constant 9 : index
    %c0_122 = arith.constant 0 : index
    %c0_123 = arith.constant 0 : index
    %228 = vector.load %arg3[%c9, %c0_122, %c0_123] : memref<12x32x16xf32, #tpu.memory_space<vmem>>, vector<1x32x16xf32>
    %229 = vector.shape_cast %228 : vector<1x32x16xf32> to vector<32x16xf32>
    %cst_124 = arith.constant dense<0.000000e+00> : vector<16x16xf32>
    %230 = tpu.matmul %186, %229, %cst_124 {dimension_numbers = #tpu.dot_dimension_numbers<[1], [0], [0], [1], [0, 0, 1, 1], [], []>} : vector<16x32xf32>, vector<32x16xf32>, vector<16x16xf32> -> vector<16x16xf32>
    %c9_125 = arith.constant 9 : index
    %c0_126 = arith.constant 0 : index
    %c0_127 = arith.constant 0 : index
    %231 = vector.load %arg4[%c9_125, %c0_126, %c0_127] : memref<12x1x16xf32, #tpu.memory_space<vmem>>, vector<1x1x16xf32>
    %232 = vector.shape_cast %231 : vector<1x1x16xf32> to vector<1x16xf32>
    %233 = vector.broadcast %232 : vector<1x16xf32> to vector<16x16xf32>
    %234 = arith.addf %230, %233 : vector<16x16xf32>
    %c10 = arith.constant 10 : index
    %c0_128 = arith.constant 0 : index
    %c0_129 = arith.constant 0 : index
    %235 = vector.load %arg3[%c10, %c0_128, %c0_129] : memref<12x32x16xf32, #tpu.memory_space<vmem>>, vector<1x32x16xf32>
    %236 = vector.shape_cast %235 : vector<1x32x16xf32> to vector<32x16xf32>
    %cst_130 = arith.constant dense<0.000000e+00> : vector<16x16xf32>
    %237 = tpu.matmul %186, %236, %cst_130 {dimension_numbers = #tpu.dot_dimension_numbers<[1], [0], [0], [1], [0, 0, 1, 1], [], []>} : vector<16x32xf32>, vector<32x16xf32>, vector<16x16xf32> -> vector<16x16xf32>
    %c10_131 = arith.constant 10 : index
    %c0_132 = arith.constant 0 : index
    %c0_133 = arith.constant 0 : index
    %238 = vector.load %arg4[%c10_131, %c0_132, %c0_133] : memref<12x1x16xf32, #tpu.memory_space<vmem>>, vector<1x1x16xf32>
    %239 = vector.shape_cast %238 : vector<1x1x16xf32> to vector<1x16xf32>
    %240 = vector.broadcast %239 : vector<1x16xf32> to vector<16x16xf32>
    %241 = arith.addf %237, %240 : vector<16x16xf32>
    %c11 = arith.constant 11 : index
    %c0_134 = arith.constant 0 : index
    %c0_135 = arith.constant 0 : index
    %242 = vector.load %arg3[%c11, %c0_134, %c0_135] : memref<12x32x16xf32, #tpu.memory_space<vmem>>, vector<1x32x16xf32>
    %243 = vector.shape_cast %242 : vector<1x32x16xf32> to vector<32x16xf32>
    %cst_136 = arith.constant dense<0.000000e+00> : vector<16x16xf32>
    %244 = tpu.matmul %186, %243, %cst_136 {dimension_numbers = #tpu.dot_dimension_numbers<[1], [0], [0], [1], [0, 0, 1, 1], [], []>} : vector<16x32xf32>, vector<32x16xf32>, vector<16x16xf32> -> vector<16x16xf32>
    %c11_137 = arith.constant 11 : index
    %c0_138 = arith.constant 0 : index
    %c0_139 = arith.constant 0 : index
    %245 = vector.load %arg4[%c11_137, %c0_138, %c0_139] : memref<12x1x16xf32, #tpu.memory_space<vmem>>, vector<1x1x16xf32>
    %246 = vector.shape_cast %245 : vector<1x1x16xf32> to vector<1x16xf32>
    %247 = vector.broadcast %246 : vector<1x16xf32> to vector<16x16xf32>
    %248 = arith.addf %244, %247 : vector<16x16xf32>
    %cst_140 = arith.constant dense<0.000000e+00> : vector<16x16xf32>
    %249 = tpu.matmul %234, %241, %cst_140 {dimension_numbers = #tpu.dot_dimension_numbers<[1], [1], [0], [0], [0, 0, 1, 0], [], []>} : vector<16x16xf32>, vector<16x16xf32>, vector<16x16xf32> -> vector<16x16xf32>
    %cst_141 = arith.constant 2.500000e-01 : f32
    %250 = vector.broadcast %cst_141 : f32 to vector<16x16xf32>
    %251 = arith.mulf %249, %250 : vector<16x16xf32>
    %252 = arith.addf %251, %26 : vector<16x16xf32>
    %cst_142 = arith.constant dense<0xFF800000> : vector<16xf32>
    %253 = vector.multi_reduction <maximumf>, %252, %cst_142 [1] : vector<16x16xf32> to vector<16xf32>
    %254 = vector.shape_cast %253 : vector<16xf32> to vector<16x1xf32>
    %255 = vector.broadcast %254 : vector<16x1xf32> to vector<16x16xf32>
    %256 = arith.subf %252, %255 : vector<16x16xf32>
    %257 = math.exp %256 : vector<16x16xf32>
    %cst_143 = arith.constant dense<0.000000e+00> : vector<16xf32>
    %258 = vector.multi_reduction <add>, %257, %cst_143 [1] : vector<16x16xf32> to vector<16xf32>
    %259 = vector.shape_cast %258 : vector<16xf32> to vector<16x1xf32>
    %260 = tpu.reciprocal %259 {approx = true} : vector<16x1xf32> -> vector<16x1xf32>
    %261 = vector.broadcast %260 : vector<16x1xf32> to vector<16x16xf32>
    %262 = arith.mulf %257, %261 : vector<16x16xf32>
    %cst_144 = arith.constant dense<0.000000e+00> : vector<16x16xf32>
    %263 = tpu.matmul %262, %248, %cst_144 {dimension_numbers = #tpu.dot_dimension_numbers<[1], [0], [0], [1], [0, 0, 1, 1], [], []>} : vector<16x16xf32>, vector<16x16xf32>, vector<16x16xf32> -> vector<16x16xf32>
    %c3_145 = arith.constant 3 : index
    %c0_146 = arith.constant 0 : index
    %c0_147 = arith.constant 0 : index
    %264 = vector.load %arg5[%c3_145, %c0_146, %c0_147] : memref<4x16x32xf32, #tpu.memory_space<vmem>>, vector<1x16x32xf32>
    %265 = vector.shape_cast %264 : vector<1x16x32xf32> to vector<16x32xf32>
    %cst_148 = arith.constant dense<0.000000e+00> : vector<16x32xf32>
    %266 = tpu.matmul %263, %265, %cst_148 {dimension_numbers = #tpu.dot_dimension_numbers<[1], [0], [0], [1], [0, 0, 1, 1], [], []>} : vector<16x16xf32>, vector<16x32xf32>, vector<16x32xf32> -> vector<16x32xf32>
    %267 = arith.addf %227, %266 : vector<16x32xf32>
    %268 = vector.extract_strided_slice %188 {offsets = [0, 0], sizes = [1, 32], strides = [1, 1]} : vector<6x32xf32> to vector<1x32xf32>
    %269 = vector.broadcast %268 : vector<1x32xf32> to vector<16x32xf32>
    %270 = arith.addf %267, %269 : vector<16x32xf32>
    %271 = arith.addf %270, %186 : vector<16x32xf32>
    %272 = vector.extract_strided_slice %188 {offsets = [1, 0], sizes = [1, 32], strides = [1, 1]} : vector<6x32xf32> to vector<1x32xf32>
    %273 = vector.extract_strided_slice %188 {offsets = [2, 0], sizes = [1, 32], strides = [1, 1]} : vector<6x32xf32> to vector<1x32xf32>
    %cst_149 = arith.constant dense<0.000000e+00> : vector<16xf32>
    %274 = vector.multi_reduction <add>, %271, %cst_149 [1] : vector<16x32xf32> to vector<16xf32>
    %275 = vector.shape_cast %274 : vector<16xf32> to vector<16x1xf32>
    %cst_150 = arith.constant 3.200000e+01 : f32
    %276 = vector.broadcast %cst_150 : f32 to vector<16x1xf32>
    %277 = arith.divf %275, %276 : vector<16x1xf32>
    %278 = vector.broadcast %277 : vector<16x1xf32> to vector<16x32xf32>
    %279 = arith.subf %271, %278 : vector<16x32xf32>
    %280 = arith.mulf %279, %279 : vector<16x32xf32>
    %cst_151 = arith.constant dense<0.000000e+00> : vector<16xf32>
    %281 = vector.multi_reduction <add>, %280, %cst_151 [1] : vector<16x32xf32> to vector<16xf32>
    %282 = vector.shape_cast %281 : vector<16xf32> to vector<16x1xf32>
    %cst_152 = arith.constant 3.200000e+01 : f32
    %283 = vector.broadcast %cst_152 : f32 to vector<16x1xf32>
    %284 = arith.divf %282, %283 : vector<16x1xf32>
    %285 = vector.broadcast %277 : vector<16x1xf32> to vector<16x32xf32>
    %286 = arith.subf %271, %285 : vector<16x32xf32>
    %cst_153 = arith.constant 9.99999996E-13 : f32
    %287 = vector.broadcast %cst_153 : f32 to vector<16x1xf32>
    %288 = arith.addf %284, %287 : vector<16x1xf32>
    %289 = math.rsqrt %288 : vector<16x1xf32>
    %290 = vector.broadcast %289 : vector<16x1xf32> to vector<16x32xf32>
    %291 = arith.mulf %286, %290 : vector<16x32xf32>
    %292 = vector.broadcast %272 : vector<1x32xf32> to vector<16x32xf32>
    %293 = arith.mulf %291, %292 : vector<16x32xf32>
    %294 = vector.broadcast %273 : vector<1x32xf32> to vector<16x32xf32>
    %295 = arith.addf %293, %294 : vector<16x32xf32>
    %c1_154 = arith.constant 1 : index
    %c0_155 = arith.constant 0 : index
    %c0_156 = arith.constant 0 : index
    %296 = vector.load %arg7[%c1_154, %c0_155, %c0_156] : memref<2x32x64xf32, #tpu.memory_space<vmem>>, vector<1x32x64xf32>
    %297 = vector.shape_cast %296 : vector<1x32x64xf32> to vector<32x64xf32>
    %cst_157 = arith.constant dense<0.000000e+00> : vector<16x64xf32>
    %298 = tpu.matmul %295, %297, %cst_157 {dimension_numbers = #tpu.dot_dimension_numbers<[1], [0], [0], [1], [0, 0, 1, 1], [], []>} : vector<16x32xf32>, vector<32x64xf32>, vector<16x64xf32> -> vector<16x64xf32>
    %c1_158 = arith.constant 1 : index
    %c0_159 = arith.constant 0 : index
    %c0_160 = arith.constant 0 : index
    %299 = vector.load %arg8[%c1_158, %c0_159, %c0_160] : memref<2x1x64xf32, #tpu.memory_space<vmem>>, vector<1x1x64xf32>
    %300 = vector.shape_cast %299 : vector<1x1x64xf32> to vector<1x64xf32>
    %301 = vector.broadcast %300 : vector<1x64xf32> to vector<16x64xf32>
    %302 = arith.addf %298, %301 : vector<16x64xf32>
    %303 = arith.mulf %302, %302 : vector<16x64xf32>
    %304 = arith.mulf %302, %303 : vector<16x64xf32>
    %cst_161 = arith.constant 4.471500e-02 : f32
    %305 = vector.broadcast %cst_161 : f32 to vector<16x64xf32>
    %306 = arith.mulf %305, %304 : vector<16x64xf32>
    %307 = arith.addf %302, %306 : vector<16x64xf32>
    %cst_162 = arith.constant 0.797884583 : f32
    %308 = vector.broadcast %cst_162 : f32 to vector<16x64xf32>
    %309 = arith.mulf %308, %307 : vector<16x64xf32>
    %310 = math.tanh %309 : vector<16x64xf32>
    %cst_163 = arith.constant 1.000000e+00 : f32
    %311 = vector.broadcast %cst_163 : f32 to vector<16x64xf32>
    %312 = arith.addf %311, %310 : vector<16x64xf32>
    %cst_164 = arith.constant 5.000000e-01 : f32
    %313 = vector.broadcast %cst_164 : f32 to vector<16x64xf32>
    %314 = arith.mulf %313, %312 : vector<16x64xf32>
    %315 = arith.mulf %302, %314 : vector<16x64xf32>
    %c1_165 = arith.constant 1 : index
    %c0_166 = arith.constant 0 : index
    %c0_167 = arith.constant 0 : index
    %316 = vector.load %arg9[%c1_165, %c0_166, %c0_167] : memref<2x64x32xf32, #tpu.memory_space<vmem>>, vector<1x64x32xf32>
    %317 = vector.shape_cast %316 : vector<1x64x32xf32> to vector<64x32xf32>
    %cst_168 = arith.constant dense<0.000000e+00> : vector<16x32xf32>
    %318 = tpu.matmul %315, %317, %cst_168 {dimension_numbers = #tpu.dot_dimension_numbers<[1], [0], [0], [1], [0, 0, 1, 1], [], []>} : vector<16x64xf32>, vector<64x32xf32>, vector<16x32xf32> -> vector<16x32xf32>
    %319 = vector.extract_strided_slice %188 {offsets = [3, 0], sizes = [1, 32], strides = [1, 1]} : vector<6x32xf32> to vector<1x32xf32>
    %320 = vector.broadcast %319 : vector<1x32xf32> to vector<16x32xf32>
    %321 = arith.addf %318, %320 : vector<16x32xf32>
    %322 = arith.addf %321, %295 : vector<16x32xf32>
    %323 = vector.extract_strided_slice %188 {offsets = [4, 0], sizes = [1, 32], strides = [1, 1]} : vector<6x32xf32> to vector<1x32xf32>
    %324 = vector.extract_strided_slice %188 {offsets = [5, 0], sizes = [1, 32], strides = [1, 1]} : vector<6x32xf32> to vector<1x32xf32>
    %cst_169 = arith.constant dense<0.000000e+00> : vector<16xf32>
    %325 = vector.multi_reduction <add>, %322, %cst_169 [1] : vector<16x32xf32> to vector<16xf32>
    %326 = vector.shape_cast %325 : vector<16xf32> to vector<16x1xf32>
    %cst_170 = arith.constant 3.200000e+01 : f32
    %327 = vector.broadcast %cst_170 : f32 to vector<16x1xf32>
    %328 = arith.divf %326, %327 : vector<16x1xf32>
    %329 = vector.broadcast %328 : vector<16x1xf32> to vector<16x32xf32>
    %330 = arith.subf %322, %329 : vector<16x32xf32>
    %331 = arith.mulf %330, %330 : vector<16x32xf32>
    %cst_171 = arith.constant dense<0.000000e+00> : vector<16xf32>
    %332 = vector.multi_reduction <add>, %331, %cst_171 [1] : vector<16x32xf32> to vector<16xf32>
    %333 = vector.shape_cast %332 : vector<16xf32> to vector<16x1xf32>
    %cst_172 = arith.constant 3.200000e+01 : f32
    %334 = vector.broadcast %cst_172 : f32 to vector<16x1xf32>
    %335 = arith.divf %333, %334 : vector<16x1xf32>
    %336 = vector.broadcast %328 : vector<16x1xf32> to vector<16x32xf32>
    %337 = arith.subf %322, %336 : vector<16x32xf32>
    %cst_173 = arith.constant 9.99999996E-13 : f32
    %338 = vector.broadcast %cst_173 : f32 to vector<16x1xf32>
    %339 = arith.addf %335, %338 : vector<16x1xf32>
    %340 = math.rsqrt %339 : vector<16x1xf32>
    %341 = vector.broadcast %340 : vector<16x1xf32> to vector<16x32xf32>
    %342 = arith.mulf %337, %341 : vector<16x32xf32>
    %343 = vector.broadcast %323 : vector<1x32xf32> to vector<16x32xf32>
    %344 = arith.mulf %342, %343 : vector<16x32xf32>
    %345 = vector.broadcast %324 : vector<1x32xf32> to vector<16x32xf32>
    %346 = arith.addf %344, %345 : vector<16x32xf32>
    %347 = vector.extract_strided_slice %346 {offsets = [0, 0], sizes = [1, 32], strides = [1, 1]} : vector<16x32xf32> to vector<1x32xf32>
    %348 = vector.extract_strided_slice %346 {offsets = [8, 0], sizes = [1, 32], strides = [1, 1]} : vector<16x32xf32> to vector<1x32xf32>
    %349 = tpu.concatenate %347, %348 in 0 : vector<1x32xf32>, vector<1x32xf32> -> vector<2x32xf32>
    %c0_174 = arith.constant 0 : index
    %c0_175 = arith.constant 0 : index
    %350 = vector.load %arg10[%c0_174, %c0_175] : memref<32x32xf32, #tpu.memory_space<vmem>>, vector<32x32xf32>
    %cst_176 = arith.constant dense<0.000000e+00> : vector<2x32xf32>
    %351 = tpu.matmul %349, %350, %cst_176 {dimension_numbers = #tpu.dot_dimension_numbers<[1], [0], [0], [1], [0, 0, 1, 1], [], []>} : vector<2x32xf32>, vector<32x32xf32>, vector<2x32xf32> -> vector<2x32xf32>
    %352 = vector.extract_strided_slice %0 {offsets = [2, 0], sizes = [1, 32], strides = [1, 1]} : vector<3x32xf32> to vector<1x32xf32>
    %353 = vector.broadcast %352 : vector<1x32xf32> to vector<2x32xf32>
    %354 = arith.addf %351, %353 : vector<2x32xf32>
    %355 = math.tanh %354 : vector<2x32xf32>
    %c0_177 = arith.constant 0 : index
    %c0_178 = arith.constant 0 : index
    %356 = vector.load %arg11[%c0_177, %c0_178] : memref<32x128xf32, #tpu.memory_space<vmem>>, vector<32x128xf32>
    %cst_179 = arith.constant dense<0.000000e+00> : vector<2x128xf32>
    %357 = tpu.matmul %355, %356, %cst_179 {dimension_numbers = #tpu.dot_dimension_numbers<[1], [0], [0], [1], [0, 0, 1, 1], [], []>} : vector<2x32xf32>, vector<32x128xf32>, vector<2x128xf32> -> vector<2x128xf32>
    %c0_180 = arith.constant 0 : index
    %c0_181 = arith.constant 0 : index
    %358 = vector.load %arg12[%c0_180, %c0_181] : memref<1x128xf32, #tpu.memory_space<vmem>>, vector<1x128xf32>
    %359 = vector.broadcast %358 : vector<1x128xf32> to vector<2x128xf32>
    %360 = arith.addf %357, %359 : vector<2x128xf32>
    %c0_182 = arith.constant 0 : index
    %c0_183 = arith.constant 0 : index
    %361 = vector.load %arg13[%c0_182, %c0_183] : memref<2x128xf32, #tpu.memory_space<vmem>>, vector<2x128xf32>
    tpu.vector_store %arg13[%c0_182, %c0_183], %360 {strides = array<i32>} : memref<2x128xf32, #tpu.memory_space<vmem>>, vector<2x128xf32>,
    return
  }
}

</mosaic_0001>

<llo_original>
// kernel: multi_task_forward.1
$region0: #{multi_task_forward.1}
  #allocation0 [shape = 'u32[]', space=smem, size = 0x4, offset = 0x4, fixed_abs, tag = 'smem constant byte address 0x4 - core index']
  #allocation1 [shape = 'u32[72,128]{1,0:T(1,128)}', space=vmem, size = 0x9000, scoped, tag = 'internal scratch']
  %s0 = inlined_call_operand.vmem [shape: f32[16,32], index: 0, kind: input, shape index: {}]
  %s1 = inlined_call_operand.vmem [shape: f32[16,16], index: 1, kind: input, shape index: {}]
  %s2 = inlined_call_operand.vmem [shape: f32[3,32], index: 2, kind: input, shape index: {}]
  %s3 = inlined_call_operand.vmem [shape: f32[12,32,16], index: 3, kind: input, shape index: {}]
  %s4 = inlined_call_operand.vmem [shape: f32[12,1,16], index: 4, kind: input, shape index: {}]
  %s5 = inlined_call_operand.vmem [shape: f32[4,16,32], index: 5, kind: input, shape index: {}]
  %s6 = inlined_call_operand.vmem [shape: f32[2,6,32], index: 6, kind: input, shape index: {}]
  %s7 = inlined_call_operand.vmem [shape: f32[2,32,64], index: 7, kind: input, shape index: {}]
  %s8 = inlined_call_operand.vmem [shape: f32[2,1,64], index: 8, kind: input, shape index: {}]
  %s9 = inlined_call_operand.vmem [shape: f32[2,64,32], index: 9, kind: input, shape index: {}]
  %s10 = inlined_call_operand.vmem [shape: f32[32,32], index: 10, kind: input, shape index: {}]
  %s11 = inlined_call_operand.vmem [shape: f32[32,128], index: 11, kind: input, shape index: {}]
  %s12 = inlined_call_operand.vmem [shape: f32[1,128], index: 12, kind: input, shape index: {}]
  %s13 = inlined_call_operand.vmem [shape: f32[2,128], index: 13, kind: output, shape index: {}]
  %s14 = sld [smem:[#allocation0]]
  $region62: #{multi_task_forward.1} parent=0
    _
  %s16 = ssub.s32 1, %s14
  %s17 = scalar_select 0, %s16, %s14
  // Predicated region
  $region2: #{multi_task_forward.1} parent=0 // pred_check
    _
  $region3: #{multi_task_forward.1} parent=0 // pred_check_branch
    %19 = sbr.rel (0) target = $region5
  $region4: #{multi_task_forward.1} parent=0 // pred_region
    _
  $region5: #{multi_task_forward.1} parent=0 // pred_fallthru
    _
  // Predicated region
  $region6: #{multi_task_forward.1} parent=0 // pred_check
    _
  $region7: #{multi_task_forward.1} parent=0 // pred_check_branch
    %21 = sbr.rel (0) target = $region9
  $region8: #{multi_task_forward.1} parent=0 // pred_region
    _
  $region9: #{multi_task_forward.1} parent=0 // pred_fallthru
    _
  // Predicated region
  $region10: #{multi_task_forward.1} parent=0 // pred_check
    _
  $region11: #{multi_task_forward.1} parent=0 // pred_check_branch
    %23 = sbr.rel (0) target = $region13
  $region12: #{multi_task_forward.1} parent=0 // pred_region
    _
  $region13: #{multi_task_forward.1} parent=0 // pred_fallthru
    _
  // Predicated region
  $region14: #{multi_task_forward.1} parent=0 // pred_check
    _
  $region15: #{multi_task_forward.1} parent=0 // pred_check_branch
    %25 = sbr.rel (0) target = $region17
  $region16: #{multi_task_forward.1} parent=0 // pred_region
    _
  $region17: #{multi_task_forward.1} parent=0 // pred_fallthru
    _
  // Predicated region
  $region18: #{multi_task_forward.1} parent=0 // pred_check
    _
  $region19: #{multi_task_forward.1} parent=0 // pred_check_branch
    %27 = sbr.rel (0) target = $region21
  $region20: #{multi_task_forward.1} parent=0 // pred_region
    _
  $region21: #{multi_task_forward.1} parent=0 // pred_fallthru
    _
  // Predicated region
  $region22: #{multi_task_forward.1} parent=0 // pred_check
    _
  $region23: #{multi_task_forward.1} parent=0 // pred_check_branch
    %29 = sbr.rel (0) target = $region25
  $region24: #{multi_task_forward.1} parent=0 // pred_region
    _
  $region25: #{multi_task_forward.1} parent=0 // pred_fallthru
    _
  // Predicated region
  $region26: #{multi_task_forward.1} parent=0 // pred_check
    _
  $region27: #{multi_task_forward.1} parent=0 // pred_check_branch
    %31 = sbr.rel (0) target = $region29
  $region28: #{multi_task_forward.1} parent=0 // pred_region
    _
  $region29: #{multi_task_forward.1} parent=0 // pred_fallthru
    _
  // Predicated region
  $region30: #{multi_task_forward.1} parent=0 // pred_check
    _
  $region31: #{multi_task_forward.1} parent=0 // pred_check_branch
    %33 = sbr.rel (0) target = $region33
  $region32: #{multi_task_forward.1} parent=0 // pred_region
    _
  $region33: #{multi_task_forward.1} parent=0 // pred_fallthru
    _
  // Predicated region
  $region34: #{multi_task_forward.1} parent=0 // pred_check
    _
  $region35: #{multi_task_forward.1} parent=0 // pred_check_branch
    %35 = sbr.rel (0) target = $region37
  $region36: #{multi_task_forward.1} parent=0 // pred_region
    _
  $region37: #{multi_task_forward.1} parent=0 // pred_fallthru
    _
  // Predicated region
  $region38: #{multi_task_forward.1} parent=0 // pred_check
    _
  $region39: #{multi_task_forward.1} parent=0 // pred_check_branch
    %37 = sbr.rel (0) target = $region41
  $region40: #{multi_task_forward.1} parent=0 // pred_region
    _
  $region41: #{multi_task_forward.1} parent=0 // pred_fallthru
    _
  // Predicated region
  $region42: #{multi_task_forward.1} parent=0 // pred_check
    _
  $region43: #{multi_task_forward.1} parent=0 // pred_check_branch
    %39 = sbr.rel (0) target = $region45
  $region44: #{multi_task_forward.1} parent=0 // pred_region
    _
  $region45: #{multi_task_forward.1} parent=0 // pred_fallthru
    _
  // Predicated region
  $region46: #{multi_task_forward.1} parent=0 // pred_check
    _
  $region47: #{multi_task_forward.1} parent=0 // pred_check_branch
    %41 = sbr.rel (0) target = $region49
  $region48: #{multi_task_forward.1} parent=0 // pred_region
    _
  $region49: #{multi_task_forward.1} parent=0 // pred_fallthru
    _
  // Predicated region
  $region50: #{multi_task_forward.1} parent=0 // pred_check
    _
  $region51: #{multi_task_forward.1} parent=0 // pred_check_branch
    %43 = sbr.rel (0) target = $region53
  $region52: #{multi_task_forward.1} parent=0 // pred_region
    _
  $region53: #{multi_task_forward.1} parent=0 // pred_fallthru
    _
  %v44 = vld [vmem:[%s2] sm:$0x7]
  %v45 = vld [vmem:[%s0] sm:$0xff]
  %v46 = vld [vmem:[%s0 + $0x8] sm:$0xff]
  %vm47 = vcmask 261120
  %v48 = vsel %vm47, %v45, 0.0
  %49 = vadd.xlane.f32.xlu0 %v48
  %v50 = vpop.xlane.xlu0 %49
  %v51 = vsel %vm47, %v46, 0.0
  %52 = vadd.xlane.f32.xlu0 %v51
  %v53 = vpop.xlane.xlu0 %52
  %v54 = vrcp.pop 32.0
  %v55 = vmul.f32 32.0, %v54
  %v56 = vsub.f32 1.0, %v55
  %v57 = vmul.f32 %v54, %v56
  %v58 = vadd.f32 %v54, %v57
  %vm59 = vweird.f32 %v54
  %v60 = vsel %vm59, %v54, %v58
  %v61 = vmul.f32 %v50, %v60
  %v62 = vmul.f32 %v53, %v60
  %v63 = vsub.f32 %v45, %v61
  %v64 = vsub.f32 %v46, %v62
  %v65 = vmul.f32 %v63, %v63
  %v66 = vmul.f32 %v64, %v64
  %v67 = vsel %vm47, %v65, 0.0
  %68 = vadd.xlane.f32.xlu0 %v67
  %v69 = vpop.xlane.xlu0 %68
  %v70 = vsel %vm47, %v66, 0.0
  %71 = vadd.xlane.f32.xlu0 %v70
  %v72 = vpop.xlane.xlu0 %71
  %v73 = vmul.f32 %v69, %v60
  %v74 = vmul.f32 %v72, %v60
  %v75 = vadd.f32 %v73, 1e-12
  %v76 = vadd.f32 %v74, 1e-12
  %v77 = vrsqrt.pop %v75
  %v78 = vmul.f32 %v77, %v75
  %v79 = vmul.f32 %v78, %v77
  %v80 = vmul.f32 0.5, %v79
  %v81 = vsub.f32 1.5, %v80
  %v82 = vmul.f32 %v77, %v81
  %vm83 = vweird.f32 %v75
  %vm84 = vweird.f32 %v77
  %vm85 = vmor %vm83, %vm84
  %v86 = vsel %vm85, %v77, %v82
  %v87 = vrsqrt.pop %v76
  %v88 = vmul.f32 %v87, %v76
  %v89 = vmul.f32 %v88, %v87
  %v90 = vmul.f32 0.5, %v89
  %v91 = vsub.f32 1.5, %v90
  %v92 = vmul.f32 %v87, %v91
  %vm93 = vweird.f32 %v76
  %vm94 = vweird.f32 %v87
  %vm95 = vmor %vm93, %vm94
  %v96 = vsel %vm95, %v87, %v92
  %v97 = vmul.f32 %v63, %v86
  %v98 = vmul.f32 %v64, %v96
  %v99 = vperm.slane %v44, 0
  %v100 = vmul.f32 %v97, %v99
  %v101 = vmul.f32 %v98, %v99
  %v102 = vperm.slane %v44, 1
  %v103 = vadd.f32 %v100, %v102
  %v104 = vadd.f32 %v101, %v102
  %v105 = vld [vmem:[%s1] sm:$0xff]
  %v106 = vld [vmem:[%s1 + $0x8] sm:$0xff]
  %v107 = vld [vmem:[%s6] sm:$0x3f]
  %v108 = vld [vmem:[%s3] sm:$0xff]
  %v109 = vld [vmem:[%s3 + $0x8] sm:$0xff]
  %v110 = vld [vmem:[%s3 + $0x10] sm:$0xff]
  %v111 = vld [vmem:[%s3 + $0x18] sm:$0xff]
  %v112 = vld [vmem:[%s4] sm:$0x1]
  %v114 = vperm.slane %v112, 0
  %v117 = vsel %vm47, %v103, 0
  %v120 = vsel %vm47, %v104, 0
  %122 = vmatpush.msra.mxu0 0.0
  %123 = vmatpush.msra.mxu0 0.0
  %124 = vmatpush.msra.mxu0 0.0
  %125 = vmatpush.msra.mxu0 0.0
  %126 = vmatpush.msra.mxu0 0.0
  %127 = vmatpush.msra.mxu0 0.0
  %128 = vmatpush.msra.mxu0 0.0
  %129 = vmatpush.msra.mxu0 0.0
  %130 = vmatpush.msra.mxu0 0.0
  %131 = vmatpush.msra.mxu0 0.0
  %132 = vmatpush.msra.mxu0 0.0
  %133 = vmatpush.msra.mxu0 0.0
  %134 = vmatpush.msra.mxu0 %v111
  %135 = vmatpush.msra.mxu0 %v110
  %136 = vmatpush.msra.mxu0 %v109
  %137 = vmatpush.msra.mxu0 %v108
  %138 = vmatmul.f32.gmra.mxu0 %v117
  %v139 = vpop.f32.mrf.mxu0
  %v140 = vadd.f32 %v114, %v139
  %141 = vmatmul.f32.gmra.mxu0 %v120
  %v142 = vpop.f32.mrf.mxu0
  %v143 = vadd.f32 %v114, %v142
  %144 = vdwg.mxu0
  %s145 = scalar_lea.vmem %s3, 32
  %v146 = vld [vmem:[%s145] sm:$0xff]
  %v147 = vld [vmem:[%s145 + $0x8] sm:$0xff]
  %v148 = vld [vmem:[%s145 + $0x10] sm:$0xff]
  %v149 = vld [vmem:[%s145 + $0x18] sm:$0xff]
  %s150 = scalar_lea.vmem %s4, 1
  %v151 = vld [vmem:[%s150] sm:$0x1]
  %v153 = vperm.slane %v151, 0
  %155 = vmatpush.msra.mxu0 0.0
  %156 = vmatpush.msra.mxu0 0.0
  %157 = vmatpush.msra.mxu0 0.0
  %158 = vmatpush.msra.mxu0 0.0
  %159 = vmatpush.msra.mxu0 0.0
  %160 = vmatpush.msra.mxu0 0.0
  %161 = vmatpush.msra.mxu0 0.0
  %162 = vmatpush.msra.mxu0 0.0
  %163 = vmatpush.msra.mxu0 0.0
  %164 = vmatpush.msra.mxu0 0.0
  %165 = vmatpush.msra.mxu0 0.0
  %166 = vmatpush.msra.mxu0 0.0
  %167 = vmatpush.msra.mxu0 %v149
  %168 = vmatpush.msra.mxu0 %v148
  %169 = vmatpush.msra.mxu0 %v147
  %170 = vmatpush.msra.mxu0 %v146
  %171 = vmatmul.f32.gmra.mxu0 %v117
  %v172 = vpop.f32.mrf.mxu0
  %v173 = vadd.f32 %v153, %v172
  %174 = vmatmul.f32.gmra.mxu0 %v120
  %v175 = vpop.f32.mrf.mxu0
  %v176 = vadd.f32 %v153, %v175
  %177 = vdwg.mxu0
  %s178 = scalar_lea.vmem %s3, 64
  %v179 = vld [vmem:[%s178] sm:$0xff]
  %v180 = vld [vmem:[%s178 + $0x8] sm:$0xff]
  %v181 = vld [vmem:[%s178 + $0x10] sm:$0xff]
  %v182 = vld [vmem:[%s178 + $0x18] sm:$0xff]
  %s183 = scalar_lea.vmem %s4, 2
  %v184 = vld [vmem:[%s183] sm:$0x1]
  %v186 = vperm.slane %v184, 0
  %188 = vmatpush.msra.mxu0 0.0
  %189 = vmatpush.msra.mxu0 0.0
  %190 = vmatpush.msra.mxu0 0.0
  %191 = vmatpush.msra.mxu0 0.0
  %192 = vmatpush.msra.mxu0 0.0
  %193 = vmatpush.msra.mxu0 0.0
  %194 = vmatpush.msra.mxu0 0.0
  %195 = vmatpush.msra.mxu0 0.0
  %196 = vmatpush.msra.mxu0 0.0
  %197 = vmatpush.msra.mxu0 0.0
  %198 = vmatpush.msra.mxu0 0.0
  %199 = vmatpush.msra.mxu0 0.0
  %200 = vmatpush.msra.mxu0 %v182
  %201 = vmatpush.msra.mxu0 %v181
  %202 = vmatpush.msra.mxu0 %v180
  %203 = vmatpush.msra.mxu0 %v179
  %204 = vmatmul.f32.gmra.mxu0 %v117
  %v205 = vpop.f32.mrf.mxu0
  %v206 = vadd.f32 %v186, %v205
  %207 = vmatmul.f32.gmra.mxu0 %v120
  %v208 = vpop.f32.mrf.mxu0
  %v209 = vadd.f32 %v186, %v208
  %210 = vdwg.mxu0
  %vm211 = vcmask 130048
  %v213 = vsel %vm211, %v140, 0
  %v216 = vsel %vm211, %v143, 0
  %v219 = vsel %vm211, %v173, 0
  %v222 = vsel %vm211, %v176, 0
  %224 = vmatpush.xpose.msra.mxu0 0.0
  %225 = vmatpush.xpose.msra.mxu0 0.0
  %226 = vmatpush.xpose.msra.mxu0 0.0
  %227 = vmatpush.xpose.msra.mxu0 0.0
  %228 = vmatpush.xpose.msra.mxu0 0.0
  %229 = vmatpush.xpose.msra.mxu0 0.0
  %230 = vmatpush.xpose.msra.mxu0 0.0
  %231 = vmatpush.xpose.msra.mxu0 0.0
  %232 = vmatpush.xpose.msra.mxu0 0.0
  %233 = vmatpush.xpose.msra.mxu0 0.0
  %234 = vmatpush.xpose.msra.mxu0 0.0
  %235 = vmatpush.xpose.msra.mxu0 0.0
  %236 = vmatpush.xpose.msra.mxu0 0.0
  %237 = vmatpush.xpose.msra.mxu0 0.0
  %238 = vmatpush.xpose.msra.mxu0 %v222
  %239 = vmatpush.xpose.msra.mxu0 %v219
  %240 = vmatmul.f32.gmra.mxu0 %v213
  %v241 = vpop.f32.mrf.mxu0
  %v242 = vadd.f32 0.0, %v241
  %243 = vmatmul.f32.gmra.mxu0 %v216
  %v244 = vpop.f32.mrf.mxu0
  %v245 = vadd.f32 0.0, %v244
  %246 = vdwg.mxu0
  %v247 = vmul.f32 %v242, 0.25
  %v248 = vmul.f32 %v245, 0.25
  %v249 = vadd.f32 %v247, %v105
  %v250 = vadd.f32 %v248, %v106
  %v251 = vsel %vm211, %v249, -inf
  %252 = vmax.xlane.f32.xlu0 %v251
  %v253 = vpop.xlane.xlu0 %252
  %v254 = vsel %vm211, %v250, -inf
  %255 = vmax.xlane.f32.xlu0 %v254
  %v256 = vpop.xlane.xlu0 %255
  %v257 = vsub.f32 %v249, %v253
  %v258 = vsub.f32 %v250, %v256
  %v259 = vmul.f32 %v257, 1.442695
  %v260 = vpow.pop %v259
  %v261 = vmul.f32 %v258, 1.442695
  %v262 = vpow.pop %v261
  %v263 = vsel %vm211, %v260, 0.0
  %264 = vadd.xlane.f32.xlu0 %v263
  %v265 = vpop.xlane.xlu0 %264
  %v266 = vsel %vm211, %v262, 0.0
  %267 = vadd.xlane.f32.xlu0 %v266
  %v268 = vpop.xlane.xlu0 %267
  %v269 = vrcp.pop %v265
  %v270 = vrcp.pop %v268
  %v271 = vmul.f32 %v260, %v269
  %v272 = vmul.f32 %v262, %v270
  %v274 = vsel %vm211, %v271, 0
  %v277 = vsel %vm211, %v272, 0
  %279 = vmatpush.msra.mxu0 0.0
  %280 = vmatpush.msra.mxu0 0.0
  %281 = vmatpush.msra.mxu0 0.0
  %282 = vmatpush.msra.mxu0 0.0
  %283 = vmatpush.msra.mxu0 0.0
  %284 = vmatpush.msra.mxu0 0.0
  %285 = vmatpush.msra.mxu0 0.0
  %286 = vmatpush.msra.mxu0 0.0
  %287 = vmatpush.msra.mxu0 0.0
  %288 = vmatpush.msra.mxu0 0.0
  %289 = vmatpush.msra.mxu0 0.0
  %290 = vmatpush.msra.mxu0 0.0
  %291 = vmatpush.msra.mxu0 0.0
  %292 = vmatpush.msra.mxu0 0.0
  %293 = vmatpush.msra.mxu0 %v209
  %294 = vmatpush.msra.mxu0 %v206
  %295 = vmatmul.f32.gmra.mxu0 %v274
  %v296 = vpop.f32.mrf.mxu0
  %v297 = vadd.f32 0.0, %v296
  %298 = vmatmul.f32.gmra.mxu0 %v277
  %v299 = vpop.f32.mrf.mxu0
  %v300 = vadd.f32 0.0, %v299
  %301 = vdwg.mxu0
  %v302 = vld [vmem:[%s5] sm:$0xff]
  %v303 = vld [vmem:[%s5 + $0x8] sm:$0xff]
  %s304 = scalar_lea.vmem %s3, 96
  %v305 = vld [vmem:[%s304] sm:$0xff]
  %v306 = vld [vmem:[%s304 + $0x8] sm:$0xff]
  %v307 = vld [vmem:[%s304 + $0x10] sm:$0xff]
  %v308 = vld [vmem:[%s304 + $0x18] sm:$0xff]
  %s309 = scalar_lea.vmem %s4, 3
  %v310 = vld [vmem:[%s309] sm:$0x1]
  %v312 = vperm.slane %v310, 0
  %314 = vmatpush.msra.mxu0 0.0
  %315 = vmatpush.msra.mxu0 0.0
  %316 = vmatpush.msra.mxu0 0.0
  %317 = vmatpush.msra.mxu0 0.0
  %318 = vmatpush.msra.mxu0 0.0
  %319 = vmatpush.msra.mxu0 0.0
  %320 = vmatpush.msra.mxu0 0.0
  %321 = vmatpush.msra.mxu0 0.0
  %322 = vmatpush.msra.mxu0 0.0
  %323 = vmatpush.msra.mxu0 0.0
  %324 = vmatpush.msra.mxu0 0.0
  %325 = vmatpush.msra.mxu0 0.0
  %326 = vmatpush.msra.mxu0 %v308
  %327 = vmatpush.msra.mxu0 %v307
  %328 = vmatpush.msra.mxu0 %v306
  %329 = vmatpush.msra.mxu0 %v305
  %330 = vmatmul.f32.gmra.mxu0 %v117
  %v331 = vpop.f32.mrf.mxu0
  %v332 = vadd.f32 %v312, %v331
  %333 = vmatmul.f32.gmra.mxu0 %v120
  %v334 = vpop.f32.mrf.mxu0
  %v335 = vadd.f32 %v312, %v334
  %336 = vdwg.mxu0
  %s337 = scalar_lea.vmem %s3, 128
  %v338 = vld [vmem:[%s337] sm:$0xff]
  %v339 = vld [vmem:[%s337 + $0x8] sm:$0xff]
  %v340 = vld [vmem:[%s337 + $0x10] sm:$0xff]
  %v341 = vld [vmem:[%s337 + $0x18] sm:$0xff]
  %s342 = scalar_lea.vmem %s4, 4
  %v343 = vld [vmem:[%s342] sm:$0x1]
  %v345 = vperm.slane %v343, 0
  %347 = vmatpush.msra.mxu0 0.0
  %348 = vmatpush.msra.mxu0 0.0
  %349 = vmatpush.msra.mxu0 0.0
  %350 = vmatpush.msra.mxu0 0.0
  %351 = vmatpush.msra.mxu0 0.0
  %352 = vmatpush.msra.mxu0 0.0
  %353 = vmatpush.msra.mxu0 0.0
  %354 = vmatpush.msra.mxu0 0.0
  %355 = vmatpush.msra.mxu0 0.0
  %356 = vmatpush.msra.mxu0 0.0
  %357 = vmatpush.msra.mxu0 0.0
  %358 = vmatpush.msra.mxu0 0.0
  %359 = vmatpush.msra.mxu0 %v341
  %360 = vmatpush.msra.mxu0 %v340
  %361 = vmatpush.msra.mxu0 %v339
  %362 = vmatpush.msra.mxu0 %v338
  %363 = vmatmul.f32.gmra.mxu0 %v117
  %v364 = vpop.f32.mrf.mxu0
  %v365 = vadd.f32 %v345, %v364
  %366 = vmatmul.f32.gmra.mxu0 %v120
  %v367 = vpop.f32.mrf.mxu0
  %v368 = vadd.f32 %v345, %v367
  %369 = vdwg.mxu0
  %s370 = scalar_lea.vmem %s3, 160
  %v371 = vld [vmem:[%s370] sm:$0xff]
  %v372 = vld [vmem:[%s370 + $0x8] sm:$0xff]
  %v373 = vld [vmem:[%s370 + $0x10] sm:$0xff]
  %v374 = vld [vmem:[%s370 + $0x18] sm:$0xff]
  %s375 = scalar_lea.vmem %s4, 5
  %v376 = vld [vmem:[%s375] sm:$0x1]
  %v378 = vperm.slane %v376, 0
  %380 = vmatpush.msra.mxu0 0.0
  %381 = vmatpush.msra.mxu0 0.0
  %382 = vmatpush.msra.mxu0 0.0
  %383 = vmatpush.msra.mxu0 0.0
  %384 = vmatpush.msra.mxu0 0.0
  %385 = vmatpush.msra.mxu0 0.0
  %386 = vmatpush.msra.mxu0 0.0
  %387 = vmatpush.msra.mxu0 0.0
  %388 = vmatpush.msra.mxu0 0.0
  %389 = vmatpush.msra.mxu0 0.0
  %390 = vmatpush.msra.mxu0 0.0
  %391 = vmatpush.msra.mxu0 0.0
  %392 = vmatpush.msra.mxu0 %v374
  %393 = vmatpush.msra.mxu0 %v373
  %394 = vmatpush.msra.mxu0 %v372
  %395 = vmatpush.msra.mxu0 %v371
  %396 = vmatmul.f32.gmra.mxu0 %v117
  %v397 = vpop.f32.mrf.mxu0
  %v398 = vadd.f32 %v378, %v397
  %399 = vmatmul.f32.gmra.mxu0 %v120
  %v400 = vpop.f32.mrf.mxu0
  %v401 = vadd.f32 %v378, %v400
  %402 = vdwg.mxu0
  %v404 = vsel %vm211, %v332, 0
  %v407 = vsel %vm211, %v335, 0
  %v410 = vsel %vm211, %v365, 0
  %v413 = vsel %vm211, %v368, 0
  %415 = vmatpush.xpose.msra.mxu0 0.0
  %416 = vmatpush.xpose.msra.mxu0 0.0
  %417 = vmatpush.xpose.msra.mxu0 0.0
  %418 = vmatpush.xpose.msra.mxu0 0.0
  %419 = vmatpush.xpose.msra.mxu0 0.0
  %420 = vmatpush.xpose.msra.mxu0 0.0
  %421 = vmatpush.xpose.msra.mxu0 0.0
  %422 = vmatpush.xpose.msra.mxu0 0.0
  %423 = vmatpush.xpose.msra.mxu0 0.0
  %424 = vmatpush.xpose.msra.mxu0 0.0
  %425 = vmatpush.xpose.msra.mxu0 0.0
  %426 = vmatpush.xpose.msra.mxu0 0.0
  %427 = vmatpush.xpose.msra.mxu0 0.0
  %428 = vmatpush.xpose.msra.mxu0 0.0
  %429 = vmatpush.xpose.msra.mxu0 %v413
  %430 = vmatpush.xpose.msra.mxu0 %v410
  %431 = vmatmul.f32.gmra.mxu0 %v404
  %v432 = vpop.f32.mrf.mxu0
  %v433 = vadd.f32 0.0, %v432
  %434 = vmatmul.f32.gmra.mxu0 %v407
  %v435 = vpop.f32.mrf.mxu0
  %v436 = vadd.f32 0.0, %v435
  %437 = vdwg.mxu0
  %v438 = vmul.f32 %v433, 0.25
  %v439 = vmul.f32 %v436, 0.25
  %v440 = vadd.f32 %v438, %v105
  %v441 = vadd.f32 %v439, %v106
  %v442 = vsel %vm211, %v440, -inf
  %443 = vmax.xlane.f32.xlu0 %v442
  %v444 = vpop.xlane.xlu0 %443
  %v445 = vsel %vm211, %v441, -inf
  %446 = vmax.xlane.f32.xlu0 %v445
  %v447 = vpop.xlane.xlu0 %446
  %v448 = vsub.f32 %v440, %v444
  %v449 = vsub.f32 %v441, %v447
  %v450 = vmul.f32 %v448, 1.442695
  %v451 = vpow.pop %v450
  %v452 = vmul.f32 %v449, 1.442695
  %v453 = vpow.pop %v452
  %v454 = vsel %vm211, %v451, 0.0
  %455 = vadd.xlane.f32.xlu0 %v454
  %v456 = vpop.xlane.xlu0 %455
  %v457 = vsel %vm211, %v453, 0.0
  %458 = vadd.xlane.f32.xlu0 %v457
  %v459 = vpop.xlane.xlu0 %458
  %v460 = vrcp.pop %v456
  %v461 = vrcp.pop %v459
  %v462 = vmul.f32 %v451, %v460
  %v463 = vmul.f32 %v453, %v461
  %v465 = vsel %vm211, %v462, 0
  %v468 = vsel %vm211, %v463, 0
  %470 = vmatpush.msra.mxu0 0.0
  %471 = vmatpush.msra.mxu0 0.0
  %472 = vmatpush.msra.mxu0 0.0
  %473 = vmatpush.msra.mxu0 0.0
  %474 = vmatpush.msra.mxu0 0.0
  %475 = vmatpush.msra.mxu0 0.0
  %476 = vmatpush.msra.mxu0 0.0
  %477 = vmatpush.msra.mxu0 0.0
  %478 = vmatpush.msra.mxu0 0.0
  %479 = vmatpush.msra.mxu0 0.0
  %480 = vmatpush.msra.mxu0 0.0
  %481 = vmatpush.msra.mxu0 0.0
  %482 = vmatpush.msra.mxu0 0.0
  %483 = vmatpush.msra.mxu0 0.0
  %484 = vmatpush.msra.mxu0 %v401
  %485 = vmatpush.msra.mxu0 %v398
  %486 = vmatmul.f32.gmra.mxu0 %v465
  %v487 = vpop.f32.mrf.mxu0
  %v488 = vadd.f32 0.0, %v487
  %489 = vmatmul.f32.gmra.mxu0 %v468
  %v490 = vpop.f32.mrf.mxu0
  %v491 = vadd.f32 0.0, %v490
  %492 = vdwg.mxu0
  %s493 = scalar_lea.vmem %s5, 16
  %v494 = vld [vmem:[%s493] sm:$0xff]
  %v495 = vld [vmem:[%s493 + $0x8] sm:$0xff]
  %v497 = vsel %vm211, %v488, 0
  %v500 = vsel %vm211, %v491, 0
  %502 = vmatpush.msra.mxu0 0.0
  %503 = vmatpush.msra.mxu0 0.0
  %504 = vmatpush.msra.mxu0 0.0
  %505 = vmatpush.msra.mxu0 0.0
  %506 = vmatpush.msra.mxu0 0.0
  %507 = vmatpush.msra.mxu0 0.0
  %508 = vmatpush.msra.mxu0 0.0
  %509 = vmatpush.msra.mxu0 0.0
  %510 = vmatpush.msra.mxu0 0.0
  %511 = vmatpush.msra.mxu0 0.0
  %512 = vmatpush.msra.mxu0 0.0
  %513 = vmatpush.msra.mxu0 0.0
  %514 = vmatpush.msra.mxu0 0.0
  %515 = vmatpush.msra.mxu0 0.0
  %516 = vmatpush.msra.mxu0 %v495
  %517 = vmatpush.msra.mxu0 %v494
  %518 = vmatmul.f32.gmra.mxu0 %v497
  %v519 = vpop.f32.mrf.mxu0
  %v520 = vadd.f32 0.0, %v519
  %521 = vmatmul.f32.gmra.mxu0 %v500
  %v522 = vpop.f32.mrf.mxu0
  %v523 = vadd.f32 0.0, %v522
  %524 = vdwg.mxu0
  %v526 = vsel %vm211, %v297, 0
  %v529 = vsel %vm211, %v300, 0
  %531 = vmatpush.msra.mxu0 0.0
  %532 = vmatpush.msra.mxu0 0.0
  %533 = vmatpush.msra.mxu0 0.0
  %534 = vmatpush.msra.mxu0 0.0
  %535 = vmatpush.msra.mxu0 0.0
  %536 = vmatpush.msra.mxu0 0.0
  %537 = vmatpush.msra.mxu0 0.0
  %538 = vmatpush.msra.mxu0 0.0
  %539 = vmatpush.msra.mxu0 0.0
  %540 = vmatpush.msra.mxu0 0.0
  %541 = vmatpush.msra.mxu0 0.0
  %542 = vmatpush.msra.mxu0 0.0
  %543 = vmatpush.msra.mxu0 0.0
  %544 = vmatpush.msra.mxu0 0.0
  %545 = vmatpush.msra.mxu0 %v303
  %546 = vmatpush.msra.mxu0 %v302
  %547 = vmatmul.f32.gmra.mxu0 %v526
  %v548 = vpop.f32.mrf.mxu0
  %v549 = vadd.f32 %v520, %v548
  %550 = vmatmul.f32.gmra.mxu0 %v529
  %v551 = vpop.f32.mrf.mxu0
  %v552 = vadd.f32 %v523, %v551
  %553 = vdwg.mxu0
  %v554 = vperm.slane %v107, 0
  %v555 = vadd.f32 %v549, %v554
  %v556 = vadd.f32 %v552, %v554
  %v557 = vadd.f32 %v555, %v103
  %v558 = vadd.f32 %v556, %v104
  %v559 = vsel %vm47, %v557, 0.0
  %560 = vadd.xlane.f32.xlu0 %v559
  %v561 = vpop.xlane.xlu0 %560
  %v562 = vsel %vm47, %v558, 0.0
  %563 = vadd.xlane.f32.xlu0 %v562
  %v564 = vpop.xlane.xlu0 %563
  %v565 = vmul.f32 %v561, %v60
  %v566 = vmul.f32 %v564, %v60
  %v567 = vsub.f32 %v557, %v565
  %v568 = vsub.f32 %v558, %v566
  %v569 = vmul.f32 %v567, %v567
  %v570 = vmul.f32 %v568, %v568
  %v571 = vsel %vm47, %v569, 0.0
  %572 = vadd.xlane.f32.xlu0 %v571
  %v573 = vpop.xlane.xlu0 %572
  %v574 = vsel %vm47, %v570, 0.0
  %575 = vadd.xlane.f32.xlu0 %v574
  %v576 = vpop.xlane.xlu0 %575
  %v577 = vmul.f32 %v573, %v60
  %v578 = vmul.f32 %v576, %v60
  %v579 = vadd.f32 %v577, 1e-12
  %v580 = vadd.f32 %v578, 1e-12
  %v581 = vrsqrt.pop %v579
  %v582 = vmul.f32 %v581, %v579
  %v583 = vmul.f32 %v582, %v581
  %v584 = vmul.f32 0.5, %v583
  %v585 = vsub.f32 1.5, %v584
  %v586 = vmul.f32 %v581, %v585
  %vm587 = vweird.f32 %v579
  %vm588 = vweird.f32 %v581
  %vm589 = vmor %vm587, %vm588
  %v590 = vsel %vm589, %v581, %v586
  %v591 = vrsqrt.pop %v580
  %v592 = vmul.f32 %v591, %v580
  %v593 = vmul.f32 %v592, %v591
  %v594 = vmul.f32 0.5, %v593
  %v595 = vsub.f32 1.5, %v594
  %v596 = vmul.f32 %v591, %v595
  %vm597 = vweird.f32 %v580
  %vm598 = vweird.f32 %v591
  %vm599 = vmor %vm597, %vm598
  %v600 = vsel %vm599, %v591, %v596
  %v601 = vmul.f32 %v567, %v590
  %v602 = vmul.f32 %v568, %v600
  %v603 = vperm.slane %v107, 1
  %v604 = vmul.f32 %v601, %v603
  %v605 = vmul.f32 %v602, %v603
  %v606 = vperm.slane %v107, 2
  %v607 = vadd.f32 %v604, %v606
  %v608 = vadd.f32 %v605, %v606
  %v609 = vld [vmem:[%s7] sm:$0xff]
  %v610 = vld [vmem:[%s7 + $0x8] sm:$0xff]
  %v611 = vld [vmem:[%s7 + $0x10] sm:$0xff]
  %v612 = vld [vmem:[%s7 + $0x18] sm:$0xff]
  %v613 = vld [vmem:[%s8] sm:$0x1]
  %v615 = vperm.slane %v613, 0
  %v618 = vsel %vm47, %v607, 0
  %v621 = vsel %vm47, %v608, 0
  %623 = vmatpush.msra.mxu0 0.0
  %624 = vmatpush.msra.mxu0 0.0
  %625 = vmatpush.msra.mxu0 0.0
  %626 = vmatpush.msra.mxu0 0.0
  %627 = vmatpush.msra.mxu0 0.0
  %628 = vmatpush.msra.mxu0 0.0
  %629 = vmatpush.msra.mxu0 0.0
  %630 = vmatpush.msra.mxu0 0.0
  %631 = vmatpush.msra.mxu0 0.0
  %632 = vmatpush.msra.mxu0 0.0
  %633 = vmatpush.msra.mxu0 0.0
  %634 = vmatpush.msra.mxu0 0.0
  %635 = vmatpush.msra.mxu0 %v612
  %636 = vmatpush.msra.mxu0 %v611
  %637 = vmatpush.msra.mxu0 %v610
  %638 = vmatpush.msra.mxu0 %v609
  %639 = vmatmul.f32.gmra.mxu0 %v618
  %v640 = vpop.f32.mrf.mxu0
  %v641 = vadd.f32 %v615, %v640
  %642 = vmatmul.f32.gmra.mxu0 %v621
  %v643 = vpop.f32.mrf.mxu0
  %v644 = vadd.f32 %v615, %v643
  %645 = vdwg.mxu0
  %v646 = vmul.f32 %v641, %v641
  %v647 = vmul.f32 %v644, %v644
  %v648 = vmul.f32 %v641, %v646
  %v649 = vmul.f32 %v644, %v647
  %v650 = vmul.f32 %v648, 0.044715
  %v651 = vmul.f32 %v649, 0.044715
  %v652 = vadd.f32 %v641, %v650
  %v653 = vadd.f32 %v644, %v651
  %v654 = vmul.f32 %v652, 0.7978846
  %v655 = vmul.f32 %v653, 0.7978846
  %v656 = vtanh.pop %v654
  %v657 = vtanh.pop %v655
  %v658 = vadd.f32 %v656, 1.0
  %v659 = vadd.f32 %v657, 1.0
  %v660 = vmul.f32 %v658, 0.5
  %v661 = vmul.f32 %v659, 0.5
  %v662 = vmul.f32 %v641, %v660
  %v663 = vmul.f32 %v644, %v661
  %v664 = vld [vmem:[%s9] sm:$0xff]
  %v665 = vld [vmem:[%s9 + $0x8] sm:$0xff]
  %v666 = vld [vmem:[%s9 + $0x10] sm:$0xff]
  %v667 = vld [vmem:[%s9 + $0x18] sm:$0xff]
  %v668 = vld [vmem:[%s9 + $0x20] sm:$0xff]
  %v669 = vld [vmem:[%s9 + $0x28] sm:$0xff]
  %v670 = vld [vmem:[%s9 + $0x30] sm:$0xff]
  %v671 = vld [vmem:[%s9 + $0x38] sm:$0xff]
  %v672 = vperm.slane %v107, 3
  %vm673 = vcmask 523264
  %v675 = vsel %vm673, %v662, 0
  %v678 = vsel %vm673, %v663, 0
  %680 = vmatpush.msra.mxu0 0.0
  %681 = vmatpush.msra.mxu0 0.0
  %682 = vmatpush.msra.mxu0 0.0
  %683 = vmatpush.msra.mxu0 0.0
  %684 = vmatpush.msra.mxu0 0.0
  %685 = vmatpush.msra.mxu0 0.0
  %686 = vmatpush.msra.mxu0 0.0
  %687 = vmatpush.msra.mxu0 0.0
  %688 = vmatpush.msra.mxu0 %v671
  %689 = vmatpush.msra.mxu0 %v670
  %690 = vmatpush.msra.mxu0 %v669
  %691 = vmatpush.msra.mxu0 %v668
  %692 = vmatpush.msra.mxu0 %v667
  %693 = vmatpush.msra.mxu0 %v666
  %694 = vmatpush.msra.mxu0 %v665
  %695 = vmatpush.msra.mxu0 %v664
  %696 = vmatmul.f32.gmra.mxu0 %v675
  %v697 = vpop.f32.mrf.mxu0
  %v698 = vadd.f32 %v672, %v697
  %699 = vmatmul.f32.gmra.mxu0 %v678
  %v700 = vpop.f32.mrf.mxu0
  %v701 = vadd.f32 %v672, %v700
  %702 = vdwg.mxu0
  %v703 = vadd.f32 %v698, %v607
  %v704 = vadd.f32 %v701, %v608
  %v705 = vsel %vm47, %v703, 0.0
  %706 = vadd.xlane.f32.xlu0 %v705
  %v707 = vpop.xlane.xlu0 %706
  %v708 = vsel %vm47, %v704, 0.0
  %709 = vadd.xlane.f32.xlu0 %v708
  %v710 = vpop.xlane.xlu0 %709
  %v711 = vmul.f32 %v707, %v60
  %v712 = vmul.f32 %v710, %v60
  %v713 = vsub.f32 %v703, %v711
  %v714 = vsub.f32 %v704, %v712
  %v715 = vmul.f32 %v713, %v713
  %v716 = vmul.f32 %v714, %v714
  %v717 = vsel %vm47, %v715, 0.0
  %718 = vadd.xlane.f32.xlu0 %v717
  %v719 = vpop.xlane.xlu0 %718
  %v720 = vsel %vm47, %v716, 0.0
  %721 = vadd.xlane.f32.xlu0 %v720
  %v722 = vpop.xlane.xlu0 %721
  %v723 = vmul.f32 %v719, %v60
  %v724 = vmul.f32 %v722, %v60
  %v725 = vadd.f32 %v723, 1e-12
  %v726 = vadd.f32 %v724, 1e-12
  %v727 = vrsqrt.pop %v725
  %v728 = vmul.f32 %v727, %v725
  %v729 = vmul.f32 %v728, %v727
  %v730 = vmul.f32 0.5, %v729
  %v731 = vsub.f32 1.5, %v730
  %v732 = vmul.f32 %v727, %v731
  %vm733 = vweird.f32 %v725
  %vm734 = vweird.f32 %v727
  %vm735 = vmor %vm733, %vm734
  %v736 = vsel %vm735, %v727, %v732
  %v737 = vrsqrt.pop %v726
  %v738 = vmul.f32 %v737, %v726
  %v739 = vmul.f32 %v738, %v737
  %v740 = vmul.f32 0.5, %v739
  %v741 = vsub.f32 1.5, %v740
  %v742 = vmul.f32 %v737, %v741
  %vm743 = vweird.f32 %v726
  %vm744 = vweird.f32 %v737
  %vm745 = vmor %vm743, %vm744
  %v746 = vsel %vm745, %v737, %v742
  %v747 = vmul.f32 %v713, %v736
  %v748 = vmul.f32 %v714, %v746
  %v749 = vperm.slane %v107, 4
  %v750 = vmul.f32 %v747, %v749
  %v751 = vmul.f32 %v748, %v749
  %v752 = vperm.slane %v107, 5
  %v753 = vadd.f32 %v750, %v752
  %v754 = vadd.f32 %v751, %v752
  %s755 = scalar_lea.vmem %s6, 8
  %v756 = vld [vmem:[%s755] sm:$0x3f]
  %s757 = scalar_lea.vmem %s3, 192
  %v758 = vld [vmem:[%s757] sm:$0xff]
  %v759 = vld [vmem:[%s757 + $0x8] sm:$0xff]
  %v760 = vld [vmem:[%s757 + $0x10] sm:$0xff]
  %v761 = vld [vmem:[%s757 + $0x18] sm:$0xff]
  %s762 = scalar_lea.vmem %s4, 6
  %v763 = vld [vmem:[%s762] sm:$0x1]
  %v765 = vperm.slane %v763, 0
  %v768 = vsel %vm47, %v753, 0
  %v771 = vsel %vm47, %v754, 0
  %773 = vmatpush.msra.mxu0 0.0
  %774 = vmatpush.msra.mxu0 0.0
  %775 = vmatpush.msra.mxu0 0.0
  %776 = vmatpush.msra.mxu0 0.0
  %777 = vmatpush.msra.mxu0 0.0
  %778 = vmatpush.msra.mxu0 0.0
  %779 = vmatpush.msra.mxu0 0.0
  %780 = vmatpush.msra.mxu0 0.0
  %781 = vmatpush.msra.mxu0 0.0
  %782 = vmatpush.msra.mxu0 0.0
  %783 = vmatpush.msra.mxu0 0.0
  %784 = vmatpush.msra.mxu0 0.0
  %785 = vmatpush.msra.mxu0 %v761
  %786 = vmatpush.msra.mxu0 %v760
  %787 = vmatpush.msra.mxu0 %v759
  %788 = vmatpush.msra.mxu0 %v758
  %789 = vmatmul.f32.gmra.mxu0 %v768
  %v790 = vpop.f32.mrf.mxu0
  %v791 = vadd.f32 %v765, %v790
  %792 = vmatmul.f32.gmra.mxu0 %v771
  %v793 = vpop.f32.mrf.mxu0
  %v794 = vadd.f32 %v765, %v793
  %795 = vdwg.mxu0
  %s796 = scalar_lea.vmem %s3, 224
  %v797 = vld [vmem:[%s796] sm:$0xff]
  %v798 = vld [vmem:[%s796 + $0x8] sm:$0xff]
  %v799 = vld [vmem:[%s796 + $0x10] sm:$0xff]
  %v800 = vld [vmem:[%s796 + $0x18] sm:$0xff]
  %s801 = scalar_lea.vmem %s4, 7
  %v802 = vld [vmem:[%s801] sm:$0x1]
  %v804 = vperm.slane %v802, 0
  %806 = vmatpush.msra.mxu0 0.0
  %807 = vmatpush.msra.mxu0 0.0
  %808 = vmatpush.msra.mxu0 0.0
  %809 = vmatpush.msra.mxu0 0.0
  %810 = vmatpush.msra.mxu0 0.0
  %811 = vmatpush.msra.mxu0 0.0
  %812 = vmatpush.msra.mxu0 0.0
  %813 = vmatpush.msra.mxu0 0.0
  %814 = vmatpush.msra.mxu0 0.0
  %815 = vmatpush.msra.mxu0 0.0
  %816 = vmatpush.msra.mxu0 0.0
  %817 = vmatpush.msra.mxu0 0.0
  %818 = vmatpush.msra.mxu0 %v800
  %819 = vmatpush.msra.mxu0 %v799
  %820 = vmatpush.msra.mxu0 %v798
  %821 = vmatpush.msra.mxu0 %v797
  %822 = vmatmul.f32.gmra.mxu0 %v768
  %v823 = vpop.f32.mrf.mxu0
  %v824 = vadd.f32 %v804, %v823
  %825 = vmatmul.f32.gmra.mxu0 %v771
  %v826 = vpop.f32.mrf.mxu0
  %v827 = vadd.f32 %v804, %v826
  %828 = vdwg.mxu0
  %s829 = scalar_lea.vmem %s3, 256
  %v830 = vld [vmem:[%s829] sm:$0xff]
  %v831 = vld [vmem:[%s829 + $0x8] sm:$0xff]
  %v832 = vld [vmem:[%s829 + $0x10] sm:$0xff]
  %v833 = vld [vmem:[%s829 + $0x18] sm:$0xff]
  %s834 = scalar_lea.vmem %s4, 8
  %v835 = vld [vmem:[%s834] sm:$0x1]
  %v837 = vperm.slane %v835, 0
  %839 = vmatpush.msra.mxu0 0.0
  %840 = vmatpush.msra.mxu0 0.0
  %841 = vmatpush.msra.mxu0 0.0
  %842 = vmatpush.msra.mxu0 0.0
  %843 = vmatpush.msra.mxu0 0.0
  %844 = vmatpush.msra.mxu0 0.0
  %845 = vmatpush.msra.mxu0 0.0
  %846 = vmatpush.msra.mxu0 0.0
  %847 = vmatpush.msra.mxu0 0.0
  %848 = vmatpush.msra.mxu0 0.0
  %849 = vmatpush.msra.mxu0 0.0
  %850 = vmatpush.msra.mxu0 0.0
  %851 = vmatpush.msra.mxu0 %v833
  %852 = vmatpush.msra.mxu0 %v832
  %853 = vmatpush.msra.mxu0 %v831
  %854 = vmatpush.msra.mxu0 %v830
  %855 = vmatmul.f32.gmra.mxu0 %v768
  %v856 = vpop.f32.mrf.mxu0
  %v857 = vadd.f32 %v837, %v856
  %858 = vmatmul.f32.gmra.mxu0 %v771
  %v859 = vpop.f32.mrf.mxu0
  %v860 = vadd.f32 %v837, %v859
  %861 = vdwg.mxu0
  %v863 = vsel %vm211, %v791, 0
  %v866 = vsel %vm211, %v794, 0
  %v869 = vsel %vm211, %v824, 0
  %v872 = vsel %vm211, %v827, 0
  %874 = vmatpush.xpose.msra.mxu0 0.0
  %875 = vmatpush.xpose.msra.mxu0 0.0
  %876 = vmatpush.xpose.msra.mxu0 0.0
  %877 = vmatpush.xpose.msra.mxu0 0.0
  %878 = vmatpush.xpose.msra.mxu0 0.0
  %879 = vmatpush.xpose.msra.mxu0 0.0
  %880 = vmatpush.xpose.msra.mxu0 0.0
  %881 = vmatpush.xpose.msra.mxu0 0.0
  %882 = vmatpush.xpose.msra.mxu0 0.0
  %883 = vmatpush.xpose.msra.mxu0 0.0
  %884 = vmatpush.xpose.msra.mxu0 0.0
  %885 = vmatpush.xpose.msra.mxu0 0.0
  %886 = vmatpush.xpose.msra.mxu0 0.0
  %887 = vmatpush.xpose.msra.mxu0 0.0
  %888 = vmatpush.xpose.msra.mxu0 %v872
  %889 = vmatpush.xpose.msra.mxu0 %v869
  %890 = vmatmul.f32.gmra.mxu0 %v863
  %v891 = vpop.f32.mrf.mxu0
  %v892 = vadd.f32 0.0, %v891
  %893 = vmatmul.f32.gmra.mxu0 %v866
  %v894 = vpop.f32.mrf.mxu0
  %v895 = vadd.f32 0.0, %v894
  %896 = vdwg.mxu0
  %v897 = vmul.f32 %v892, 0.25
  %v898 = vmul.f32 %v895, 0.25
  %v899 = vadd.f32 %v897, %v105
  %v900 = vadd.f32 %v898, %v106
  %v901 = vsel %vm211, %v899, -inf
  %902 = vmax.xlane.f32.xlu0 %v901
  %v903 = vpop.xlane.xlu0 %902
  %v904 = vsel %vm211, %v900, -inf
  %905 = vmax.xlane.f32.xlu0 %v904
  %v906 = vpop.xlane.xlu0 %905
  %v907 = vsub.f32 %v899, %v903
  %v908 = vsub.f32 %v900, %v906
  %v909 = vmul.f32 %v907, 1.442695
  %v910 = vpow.pop %v909
  %v911 = vmul.f32 %v908, 1.442695
  %v912 = vpow.pop %v911
  %v913 = vsel %vm211, %v910, 0.0
  %914 = vadd.xlane.f32.xlu0 %v913
  %v915 = vpop.xlane.xlu0 %914
  %v916 = vsel %vm211, %v912, 0.0
  %917 = vadd.xlane.f32.xlu0 %v916
  %v918 = vpop.xlane.xlu0 %917
  %v919 = vrcp.pop %v915
  %v920 = vrcp.pop %v918
  %v921 = vmul.f32 %v910, %v919
  %v922 = vmul.f32 %v912, %v920
  %v924 = vsel %vm211, %v921, 0
  %v927 = vsel %vm211, %v922, 0
  %929 = vmatpush.msra.mxu0 0.0
  %930 = vmatpush.msra.mxu0 0.0
  %931 = vmatpush.msra.mxu0 0.0
  %932 = vmatpush.msra.mxu0 0.0
  %933 = vmatpush.msra.mxu0 0.0
  %934 = vmatpush.msra.mxu0 0.0
  %935 = vmatpush.msra.mxu0 0.0
  %936 = vmatpush.msra.mxu0 0.0
  %937 = vmatpush.msra.mxu0 0.0
  %938 = vmatpush.msra.mxu0 0.0
  %939 = vmatpush.msra.mxu0 0.0
  %940 = vmatpush.msra.mxu0 0.0
  %941 = vmatpush.msra.mxu0 0.0
  %942 = vmatpush.msra.mxu0 0.0
  %943 = vmatpush.msra.mxu0 %v860
  %944 = vmatpush.msra.mxu0 %v857
  %945 = vmatmul.f32.gmra.mxu0 %v924
  %v946 = vpop.f32.mrf.mxu0
  %v947 = vadd.f32 0.0, %v946
  %948 = vmatmul.f32.gmra.mxu0 %v927
  %v949 = vpop.f32.mrf.mxu0
  %v950 = vadd.f32 0.0, %v949
  %951 = vdwg.mxu0
  %s952 = scalar_lea.vmem %s5, 32
  %v953 = vld [vmem:[%s952] sm:$0xff]
  %v954 = vld [vmem:[%s952 + $0x8] sm:$0xff]
  %s955 = scalar_lea.vmem %s3, 288
  %v956 = vld [vmem:[%s955] sm:$0xff]
  %v957 = vld [vmem:[%s955 + $0x8] sm:$0xff]
  %v958 = vld [vmem:[%s955 + $0x10] sm:$0xff]
  %v959 = vld [vmem:[%s955 + $0x18] sm:$0xff]
  %s960 = scalar_lea.vmem %s4, 9
  %v961 = vld [vmem:[%s960] sm:$0x1]
  %v963 = vperm.slane %v961, 0
  %965 = vmatpush.msra.mxu0 0.0
  %966 = vmatpush.msra.mxu0 0.0
  %967 = vmatpush.msra.mxu0 0.0
  %968 = vmatpush.msra.mxu0 0.0
  %969 = vmatpush.msra.mxu0 0.0
  %970 = vmatpush.msra.mxu0 0.0
  %971 = vmatpush.msra.mxu0 0.0
  %972 = vmatpush.msra.mxu0 0.0
  %973 = vmatpush.msra.mxu0 0.0
  %974 = vmatpush.msra.mxu0 0.0
  %975 = vmatpush.msra.mxu0 0.0
  %976 = vmatpush.msra.mxu0 0.0
  %977 = vmatpush.msra.mxu0 %v959
  %978 = vmatpush.msra.mxu0 %v958
  %979 = vmatpush.msra.mxu0 %v957
  %980 = vmatpush.msra.mxu0 %v956
  %981 = vmatmul.f32.gmra.mxu0 %v768
  %v982 = vpop.f32.mrf.mxu0
  %v983 = vadd.f32 %v963, %v982
  %984 = vmatmul.f32.gmra.mxu0 %v771
  %v985 = vpop.f32.mrf.mxu0
  %v986 = vadd.f32 %v963, %v985
  %987 = vdwg.mxu0
  %s988 = scalar_lea.vmem %s3, 320
  %v989 = vld [vmem:[%s988] sm:$0xff]
  %v990 = vld [vmem:[%s988 + $0x8] sm:$0xff]
  %v991 = vld [vmem:[%s988 + $0x10] sm:$0xff]
  %v992 = vld [vmem:[%s988 + $0x18] sm:$0xff]
  %s993 = scalar_lea.vmem %s4, 10
  %v994 = vld [vmem:[%s993] sm:$0x1]
  %v996 = vperm.slane %v994, 0
  %998 = vmatpush.msra.mxu0 0.0
  %999 = vmatpush.msra.mxu0 0.0
  %1000 = vmatpush.msra.mxu0 0.0
  %1001 = vmatpush.msra.mxu0 0.0
  %1002 = vmatpush.msra.mxu0 0.0
  %1003 = vmatpush.msra.mxu0 0.0
  %1004 = vmatpush.msra.mxu0 0.0
  %1005 = vmatpush.msra.mxu0 0.0
  %1006 = vmatpush.msra.mxu0 0.0
  %1007 = vmatpush.msra.mxu0 0.0
  %1008 = vmatpush.msra.mxu0 0.0
  %1009 = vmatpush.msra.mxu0 0.0
  %1010 = vmatpush.msra.mxu0 %v992
  %1011 = vmatpush.msra.mxu0 %v991
  %1012 = vmatpush.msra.mxu0 %v990
  %1013 = vmatpush.msra.mxu0 %v989
  %1014 = vmatmul.f32.gmra.mxu0 %v768
  %v1015 = vpop.f32.mrf.mxu0
  %v1016 = vadd.f32 %v996, %v1015
  %1017 = vmatmul.f32.gmra.mxu0 %v771
  %v1018 = vpop.f32.mrf.mxu0
  %v1019 = vadd.f32 %v996, %v1018
  %1020 = vdwg.mxu0
  %s1021 = scalar_lea.vmem %s3, 352
  %v1022 = vld [vmem:[%s1021] sm:$0xff]
  %v1023 = vld [vmem:[%s1021 + $0x8] sm:$0xff]
  %v1024 = vld [vmem:[%s1021 + $0x10] sm:$0xff]
  %v1025 = vld [vmem:[%s1021 + $0x18] sm:$0xff]
  %s1026 = scalar_lea.vmem %s4, 11
  %v1027 = vld [vmem:[%s1026] sm:$0x1]
  %v1029 = vperm.slane %v1027, 0
  %1031 = vmatpush.msra.mxu0 0.0
  %1032 = vmatpush.msra.mxu0 0.0
  %1033 = vmatpush.msra.mxu0 0.0
  %1034 = vmatpush.msra.mxu0 0.0
  %1035 = vmatpush.msra.mxu0 0.0
  %1036 = vmatpush.msra.mxu0 0.0
  %1037 = vmatpush.msra.mxu0 0.0
  %1038 = vmatpush.msra.mxu0 0.0
  %1039 = vmatpush.msra.mxu0 0.0
  %1040 = vmatpush.msra.mxu0 0.0
  %1041 = vmatpush.msra.mxu0 0.0
  %1042 = vmatpush.msra.mxu0 0.0
  %1043 = vmatpush.msra.mxu0 %v1025
  %1044 = vmatpush.msra.mxu0 %v1024
  %1045 = vmatpush.msra.mxu0 %v1023
  %1046 = vmatpush.msra.mxu0 %v1022
  %1047 = vmatmul.f32.gmra.mxu0 %v768
  %v1048 = vpop.f32.mrf.mxu0
  %v1049 = vadd.f32 %v1029, %v1048
  %1050 = vmatmul.f32.gmra.mxu0 %v771
  %v1051 = vpop.f32.mrf.mxu0
  %v1052 = vadd.f32 %v1029, %v1051
  %1053 = vdwg.mxu0
  %v1055 = vsel %vm211, %v983, 0
  %v1058 = vsel %vm211, %v986, 0
  %v1061 = vsel %vm211, %v1016, 0
  %v1064 = vsel %vm211, %v1019, 0
  %1066 = vmatpush.xpose.msra.mxu0 0.0
  %1067 = vmatpush.xpose.msra.mxu0 0.0
  %1068 = vmatpush.xpose.msra.mxu0 0.0
  %1069 = vmatpush.xpose.msra.mxu0 0.0
  %1070 = vmatpush.xpose.msra.mxu0 0.0
  %1071 = vmatpush.xpose.msra.mxu0 0.0
  %1072 = vmatpush.xpose.msra.mxu0 0.0
  %1073 = vmatpush.xpose.msra.mxu0 0.0
  %1074 = vmatpush.xpose.msra.mxu0 0.0
  %1075 = vmatpush.xpose.msra.mxu0 0.0
  %1076 = vmatpush.xpose.msra.mxu0 0.0
  %1077 = vmatpush.xpose.msra.mxu0 0.0
  %1078 = vmatpush.xpose.msra.mxu0 0.0
  %1079 = vmatpush.xpose.msra.mxu0 0.0
  %1080 = vmatpush.xpose.msra.mxu0 %v1064
  %1081 = vmatpush.xpose.msra.mxu0 %v1061
  %1082 = vmatmul.f32.gmra.mxu0 %v1055
  %v1083 = vpop.f32.mrf.mxu0
  %v1084 = vadd.f32 0.0, %v1083
  %1085 = vmatmul.f32.gmra.mxu0 %v1058
  %v1086 = vpop.f32.mrf.mxu0
  %v1087 = vadd.f32 0.0, %v1086
  %1088 = vdwg.mxu0
  %v1089 = vmul.f32 %v1084, 0.25
  %v1090 = vmul.f32 %v1087, 0.25
  %v1091 = vadd.f32 %v1089, %v105
  %v1092 = vadd.f32 %v1090, %v106
  %v1093 = vsel %vm211, %v1091, -inf
  %1094 = vmax.xlane.f32.xlu0 %v1093
  %v1095 = vpop.xlane.xlu0 %1094
  %v1096 = vsel %vm211, %v1092, -inf
  %1097 = vmax.xlane.f32.xlu0 %v1096
  %v1098 = vpop.xlane.xlu0 %1097
  %v1099 = vsub.f32 %v1091, %v1095
  %v1100 = vsub.f32 %v1092, %v1098
  %v1101 = vmul.f32 %v1099, 1.442695
  %v1102 = vpow.pop %v1101
  %v1103 = vmul.f32 %v1100, 1.442695
  %v1104 = vpow.pop %v1103
  %v1105 = vsel %vm211, %v1102, 0.0
  %1106 = vadd.xlane.f32.xlu0 %v1105
  %v1107 = vpop.xlane.xlu0 %1106
  %v1108 = vsel %vm211, %v1104, 0.0
  %1109 = vadd.xlane.f32.xlu0 %v1108
  %v1110 = vpop.xlane.xlu0 %1109
  %v1111 = vrcp.pop %v1107
  %v1112 = vrcp.pop %v1110
  %v1113 = vmul.f32 %v1102, %v1111
  %v1114 = vmul.f32 %v1104, %v1112
  %v1116 = vsel %vm211, %v1113, 0
  %v1119 = vsel %vm211, %v1114, 0
  %1121 = vmatpush.msra.mxu0 0.0
  %1122 = vmatpush.msra.mxu0 0.0
  %1123 = vmatpush.msra.mxu0 0.0
  %1124 = vmatpush.msra.mxu0 0.0
  %1125 = vmatpush.msra.mxu0 0.0
  %1126 = vmatpush.msra.mxu0 0.0
  %1127 = vmatpush.msra.mxu0 0.0
  %1128 = vmatpush.msra.mxu0 0.0
  %1129 = vmatpush.msra.mxu0 0.0
  %1130 = vmatpush.msra.mxu0 0.0
  %1131 = vmatpush.msra.mxu0 0.0
  %1132 = vmatpush.msra.mxu0 0.0
  %1133 = vmatpush.msra.mxu0 0.0
  %1134 = vmatpush.msra.mxu0 0.0
  %1135 = vmatpush.msra.mxu0 %v1052
  %1136 = vmatpush.msra.mxu0 %v1049
  %1137 = vmatmul.f32.gmra.mxu0 %v1116
  %v1138 = vpop.f32.mrf.mxu0
  %v1139 = vadd.f32 0.0, %v1138
  %1140 = vmatmul.f32.gmra.mxu0 %v1119
  %v1141 = vpop.f32.mrf.mxu0
  %v1142 = vadd.f32 0.0, %v1141
  %1143 = vdwg.mxu0
  %s1144 = scalar_lea.vmem %s5, 48
  %v1145 = vld [vmem:[%s1144] sm:$0xff]
  %v1146 = vld [vmem:[%s1144 + $0x8] sm:$0xff]
  %v1148 = vsel %vm211, %v1139, 0
  %v1151 = vsel %vm211, %v1142, 0
  %1153 = vmatpush.msra.mxu0 0.0
  %1154 = vmatpush.msra.mxu0 0.0
  %1155 = vmatpush.msra.mxu0 0.0
  %1156 = vmatpush.msra.mxu0 0.0
  %1157 = vmatpush.msra.mxu0 0.0
  %1158 = vmatpush.msra.mxu0 0.0
  %1159 = vmatpush.msra.mxu0 0.0
  %1160 = vmatpush.msra.mxu0 0.0
  %1161 = vmatpush.msra.mxu0 0.0
  %1162 = vmatpush.msra.mxu0 0.0
  %1163 = vmatpush.msra.mxu0 0.0
  %1164 = vmatpush.msra.mxu0 0.0
  %1165 = vmatpush.msra.mxu0 0.0
  %1166 = vmatpush.msra.mxu0 0.0
  %1167 = vmatpush.msra.mxu0 %v1146
  %1168 = vmatpush.msra.mxu0 %v1145
  %1169 = vmatmul.f32.gmra.mxu0 %v1148
  %v1170 = vpop.f32.mrf.mxu0
  %v1171 = vadd.f32 0.0, %v1170
  %1172 = vmatmul.f32.gmra.mxu0 %v1151
  %v1173 = vpop.f32.mrf.mxu0
  %v1174 = vadd.f32 0.0, %v1173
  %1175 = vdwg.mxu0
  %v1177 = vsel %vm211, %v947, 0
  %v1180 = vsel %vm211, %v950, 0
  %1182 = vmatpush.msra.mxu0 0.0
  %1183 = vmatpush.msra.mxu0 0.0
  %1184 = vmatpush.msra.mxu0 0.0
  %1185 = vmatpush.msra.mxu0 0.0
  %1186 = vmatpush.msra.mxu0 0.0
  %1187 = vmatpush.msra.mxu0 0.0
  %1188 = vmatpush.msra.mxu0 0.0
  %1189 = vmatpush.msra.mxu0 0.0
  %1190 = vmatpush.msra.mxu0 0.0
  %1191 = vmatpush.msra.mxu0 0.0
  %1192 = vmatpush.msra.mxu0 0.0
  %1193 = vmatpush.msra.mxu0 0.0
  %1194 = vmatpush.msra.mxu0 0.0
  %1195 = vmatpush.msra.mxu0 0.0
  %1196 = vmatpush.msra.mxu0 %v954
  %1197 = vmatpush.msra.mxu0 %v953
  %1198 = vmatmul.f32.gmra.mxu0 %v1177
  %v1199 = vpop.f32.mrf.mxu0
  %v1200 = vadd.f32 %v1171, %v1199
  %1201 = vmatmul.f32.gmra.mxu0 %v1180
  %v1202 = vpop.f32.mrf.mxu0
  %v1203 = vadd.f32 %v1174, %v1202
  %1204 = vdwg.mxu0
  %v1205 = vperm.slane %v756, 0
  %v1206 = vadd.f32 %v1200, %v1205
  %v1207 = vadd.f32 %v1203, %v1205
  %v1208 = vadd.f32 %v1206, %v753
  %v1209 = vadd.f32 %v1207, %v754
  %v1210 = vsel %vm47, %v1208, 0.0
  %1211 = vadd.xlane.f32.xlu0 %v1210
  %v1212 = vpop.xlane.xlu0 %1211
  %v1213 = vsel %vm47, %v1209, 0.0
  %1214 = vadd.xlane.f32.xlu0 %v1213
  %v1215 = vpop.xlane.xlu0 %1214
  %v1216 = vmul.f32 %v1212, %v60
  %v1217 = vmul.f32 %v1215, %v60
  %v1218 = vsub.f32 %v1208, %v1216
  %v1219 = vsub.f32 %v1209, %v1217
  %v1220 = vmul.f32 %v1218, %v1218
  %v1221 = vmul.f32 %v1219, %v1219
  %v1222 = vsel %vm47, %v1220, 0.0
  %1223 = vadd.xlane.f32.xlu0 %v1222
  %v1224 = vpop.xlane.xlu0 %1223
  %v1225 = vsel %vm47, %v1221, 0.0
  %1226 = vadd.xlane.f32.xlu0 %v1225
  %v1227 = vpop.xlane.xlu0 %1226
  %v1228 = vmul.f32 %v1224, %v60
  %v1229 = vmul.f32 %v1227, %v60
  %v1230 = vadd.f32 %v1228, 1e-12
  %v1231 = vadd.f32 %v1229, 1e-12
  %v1232 = vrsqrt.pop %v1230
  %v1233 = vmul.f32 %v1232, %v1230
  %v1234 = vmul.f32 %v1233, %v1232
  %v1235 = vmul.f32 0.5, %v1234
  %v1236 = vsub.f32 1.5, %v1235
  %v1237 = vmul.f32 %v1232, %v1236
  %vm1238 = vweird.f32 %v1230
  %vm1239 = vweird.f32 %v1232
  %vm1240 = vmor %vm1238, %vm1239
  %v1241 = vsel %vm1240, %v1232, %v1237
  %v1242 = vrsqrt.pop %v1231
  %v1243 = vmul.f32 %v1242, %v1231
  %v1244 = vmul.f32 %v1243, %v1242
  %v1245 = vmul.f32 0.5, %v1244
  %v1246 = vsub.f32 1.5, %v1245
  %v1247 = vmul.f32 %v1242, %v1246
  %vm1248 = vweird.f32 %v1231
  %vm1249 = vweird.f32 %v1242
  %vm1250 = vmor %vm1248, %vm1249
  %v1251 = vsel %vm1250, %v1242, %v1247
  %v1252 = vmul.f32 %v1218, %v1241
  %v1253 = vmul.f32 %v1219, %v1251
  %v1254 = vperm.slane %v756, 1
  %v1255 = vmul.f32 %v1252, %v1254
  %v1256 = vmul.f32 %v1253, %v1254
  %v1257 = vperm.slane %v756, 2
  %v1258 = vadd.f32 %v1255, %v1257
  %v1259 = vadd.f32 %v1256, %v1257
  %s1260 = scalar_lea.vmem %s7, 32
  %v1261 = vld [vmem:[%s1260] sm:$0xff]
  %v1262 = vld [vmem:[%s1260 + $0x8] sm:$0xff]
  %v1263 = vld [vmem:[%s1260 + $0x10] sm:$0xff]
  %v1264 = vld [vmem:[%s1260 + $0x18] sm:$0xff]
  %s1265 = scalar_lea.vmem %s8, 1
  %v1266 = vld [vmem:[%s1265] sm:$0x1]
  %v1268 = vperm.slane %v1266, 0
  %v1271 = vsel %vm47, %v1258, 0
  %v1274 = vsel %vm47, %v1259, 0
  %1276 = vmatpush.msra.mxu0 0.0
  %1277 = vmatpush.msra.mxu0 0.0
  %1278 = vmatpush.msra.mxu0 0.0
  %1279 = vmatpush.msra.mxu0 0.0
  %1280 = vmatpush.msra.mxu0 0.0
  %1281 = vmatpush.msra.mxu0 0.0
  %1282 = vmatpush.msra.mxu0 0.0
  %1283 = vmatpush.msra.mxu0 0.0
  %1284 = vmatpush.msra.mxu0 0.0
  %1285 = vmatpush.msra.mxu0 0.0
  %1286 = vmatpush.msra.mxu0 0.0
  %1287 = vmatpush.msra.mxu0 0.0
  %1288 = vmatpush.msra.mxu0 %v1264
  %1289 = vmatpush.msra.mxu0 %v1263
  %1290 = vmatpush.msra.mxu0 %v1262
  %1291 = vmatpush.msra.mxu0 %v1261
  %1292 = vmatmul.f32.gmra.mxu0 %v1271
  %v1293 = vpop.f32.mrf.mxu0
  %v1294 = vadd.f32 %v1268, %v1293
  %1295 = vmatmul.f32.gmra.mxu0 %v1274
  %v1296 = vpop.f32.mrf.mxu0
  %v1297 = vadd.f32 %v1268, %v1296
  %1298 = vdwg.mxu0
  %v1299 = vmul.f32 %v1294, %v1294
  %v1300 = vmul.f32 %v1297, %v1297
  %v1301 = vmul.f32 %v1294, %v1299
  %v1302 = vmul.f32 %v1297, %v1300
  %v1303 = vmul.f32 %v1301, 0.044715
  %v1304 = vmul.f32 %v1302, 0.044715
  %v1305 = vadd.f32 %v1294, %v1303
  %v1306 = vadd.f32 %v1297, %v1304
  %v1307 = vmul.f32 %v1305, 0.7978846
  %v1308 = vmul.f32 %v1306, 0.7978846
  %v1309 = vtanh.pop %v1307
  %v1310 = vtanh.pop %v1308
  %v1311 = vadd.f32 %v1309, 1.0
  %v1312 = vadd.f32 %v1310, 1.0
  %v1313 = vmul.f32 %v1311, 0.5
  %v1314 = vmul.f32 %v1312, 0.5
  %v1315 = vmul.f32 %v1294, %v1313
  %v1316 = vmul.f32 %v1297, %v1314
  %s1317 = scalar_lea.vmem %s9, 64
  %v1318 = vld [vmem:[%s1317] sm:$0xff]
  %v1319 = vld [vmem:[%s1317 + $0x8] sm:$0xff]
  %v1320 = vld [vmem:[%s1317 + $0x10] sm:$0xff]
  %v1321 = vld [vmem:[%s1317 + $0x18] sm:$0xff]
  %v1322 = vld [vmem:[%s1317 + $0x20] sm:$0xff]
  %v1323 = vld [vmem:[%s1317 + $0x28] sm:$0xff]
  %v1324 = vld [vmem:[%s1317 + $0x30] sm:$0xff]
  %v1325 = vld [vmem:[%s1317 + $0x38] sm:$0xff]
  %v1326 = vperm.slane %v756, 3
  %v1328 = vsel %vm673, %v1315, 0
  %v1331 = vsel %vm673, %v1316, 0
  %1333 = vmatpush.msra.mxu0 0.0
  %1334 = vmatpush.msra.mxu0 0.0
  %1335 = vmatpush.msra.mxu0 0.0
  %1336 = vmatpush.msra.mxu0 0.0
  %1337 = vmatpush.msra.mxu0 0.0
  %1338 = vmatpush.msra.mxu0 0.0
  %1339 = vmatpush.msra.mxu0 0.0
  %1340 = vmatpush.msra.mxu0 0.0
  %1341 = vmatpush.msra.mxu0 %v1325
  %1342 = vmatpush.msra.mxu0 %v1324
  %1343 = vmatpush.msra.mxu0 %v1323
  %1344 = vmatpush.msra.mxu0 %v1322
  %1345 = vmatpush.msra.mxu0 %v1321
  %1346 = vmatpush.msra.mxu0 %v1320
  %1347 = vmatpush.msra.mxu0 %v1319
  %1348 = vmatpush.msra.mxu0 %v1318
  %1349 = vmatmul.f32.gmra.mxu0 %v1328
  %v1350 = vpop.f32.mrf.mxu0
  %v1351 = vadd.f32 %v1326, %v1350
  %1352 = vmatmul.f32.gmra.mxu0 %v1331
  %v1353 = vpop.f32.mrf.mxu0
  %v1354 = vadd.f32 %v1326, %v1353
  %1355 = vdwg.mxu0
  %v1356 = vadd.f32 %v1351, %v1258
  %v1357 = vadd.f32 %v1354, %v1259
  %v1358 = vsel %vm47, %v1356, 0.0
  %1359 = vadd.xlane.f32.xlu0 %v1358
  %v1360 = vpop.xlane.xlu0 %1359
  %v1361 = vsel %vm47, %v1357, 0.0
  %1362 = vadd.xlane.f32.xlu0 %v1361
  %v1363 = vpop.xlane.xlu0 %1362
  %v1364 = vmul.f32 %v1360, %v60
  %v1365 = vmul.f32 %v1363, %v60
  %v1366 = vsub.f32 %v1356, %v1364
  %v1367 = vsub.f32 %v1357, %v1365
  %v1368 = vmul.f32 %v1366, %v1366
  %v1369 = vmul.f32 %v1367, %v1367
  %v1370 = vsel %vm47, %v1368, 0.0
  %1371 = vadd.xlane.f32.xlu0 %v1370
  %v1372 = vpop.xlane.xlu0 %1371
  %v1373 = vsel %vm47, %v1369, 0.0
  %1374 = vadd.xlane.f32.xlu0 %v1373
  %v1375 = vpop.xlane.xlu0 %1374
  %v1376 = vmul.f32 %v1372, %v60
  %v1377 = vmul.f32 %v1375, %v60
  %v1378 = vadd.f32 %v1376, 1e-12
  %v1379 = vadd.f32 %v1377, 1e-12
  %v1380 = vrsqrt.pop %v1378
  %v1381 = vmul.f32 %v1380, %v1378
  %v1382 = vmul.f32 %v1381, %v1380
  %v1383 = vmul.f32 0.5, %v1382
  %v1384 = vsub.f32 1.5, %v1383
  %v1385 = vmul.f32 %v1380, %v1384
  %vm1386 = vweird.f32 %v1378
  %vm1387 = vweird.f32 %v1380
  %vm1388 = vmor %vm1386, %vm1387
  %v1389 = vsel %vm1388, %v1380, %v1385
  %v1390 = vrsqrt.pop %v1379
  %v1391 = vmul.f32 %v1390, %v1379
  %v1392 = vmul.f32 %v1391, %v1390
  %v1393 = vmul.f32 0.5, %v1392
  %v1394 = vsub.f32 1.5, %v1393
  %v1395 = vmul.f32 %v1390, %v1394
  %vm1396 = vweird.f32 %v1379
  %vm1397 = vweird.f32 %v1390
  %vm1398 = vmor %vm1396, %vm1397
  %v1399 = vsel %vm1398, %v1390, %v1395
  %v1400 = vmul.f32 %v1366, %v1389
  %v1401 = vmul.f32 %v1367, %v1399
  %v1402 = vperm.slane %v756, 4
  %v1403 = vmul.f32 %v1400, %v1402
  %v1404 = vmul.f32 %v1401, %v1402
  %v1405 = vperm.slane %v756, 5
  %v1406 = vadd.f32 %v1403, %v1405
  %v1407 = vadd.f32 %v1404, %v1405
  %v1409 = vrot.slane %v1407, 7
  %vm1411 = vcmask 1040384
  %v1412 = vsel %vm1411, %v1406, %v1409
  %v1413 = vld [vmem:[%s10] sm:$0xff]
  %v1414 = vld [vmem:[%s10 + $0x8] sm:$0xff]
  %v1415 = vld [vmem:[%s10 + $0x10] sm:$0xff]
  %v1416 = vld [vmem:[%s10 + $0x18] sm:$0xff]
  %v1417 = vperm.slane %v44, 2
  %v1419 = vsel %vm47, %v1412, 0
  %1421 = vmatpush.msra.mxu0 0.0
  %1422 = vmatpush.msra.mxu0 0.0
  %1423 = vmatpush.msra.mxu0 0.0
  %1424 = vmatpush.msra.mxu0 0.0
  %1425 = vmatpush.msra.mxu0 0.0
  %1426 = vmatpush.msra.mxu0 0.0
  %1427 = vmatpush.msra.mxu0 0.0
  %1428 = vmatpush.msra.mxu0 0.0
  %1429 = vmatpush.msra.mxu0 0.0
  %1430 = vmatpush.msra.mxu0 0.0
  %1431 = vmatpush.msra.mxu0 0.0
  %1432 = vmatpush.msra.mxu0 0.0
  %1433 = vmatpush.msra.mxu0 %v1416
  %1434 = vmatpush.msra.mxu0 %v1415
  %1435 = vmatpush.msra.mxu0 %v1414
  %1436 = vmatpush.msra.mxu0 %v1413
  %1437 = vmatmul.f32.gmra.mxu0 %v1419
  %v1438 = vpop.f32.mrf.mxu0
  %v1439 = vadd.f32 %v1417, %v1438
  %1440 = vdwg.mxu0
  %v1441 = vtanh.pop %v1439
  %v1442 = vld [vmem:[%s11] sm:$0xff]
  %v1443 = vld [vmem:[%s11 + $0x8] sm:$0xff]
  %v1444 = vld [vmem:[%s11 + $0x10] sm:$0xff]
  %v1445 = vld [vmem:[%s11 + $0x18] sm:$0xff]
  %v1446 = vld [vmem:[%s12] sm:$0x1]
  %v1448 = vperm.slane %v1446, 0
  %v1451 = vsel %vm47, %v1441, 0
  %1453 = vmatpush.msra.mxu0 0.0
  %1454 = vmatpush.msra.mxu0 0.0
  %1455 = vmatpush.msra.mxu0 0.0
  %1456 = vmatpush.msra.mxu0 0.0
  %1457 = vmatpush.msra.mxu0 0.0
  %1458 = vmatpush.msra.mxu0 0.0
  %1459 = vmatpush.msra.mxu0 0.0
  %1460 = vmatpush.msra.mxu0 0.0
  %1461 = vmatpush.msra.mxu0 0.0
  %1462 = vmatpush.msra.mxu0 0.0
  %1463 = vmatpush.msra.mxu0 0.0
  %1464 = vmatpush.msra.mxu0 0.0
  %1465 = vmatpush.msra.mxu0 %v1445
  %1466 = vmatpush.msra.mxu0 %v1444
  %1467 = vmatpush.msra.mxu0 %v1443
  %1468 = vmatpush.msra.mxu0 %v1442
  %1469 = vmatmul.f32.gmra.mxu0 %v1451
  %v1470 = vpop.f32.mrf.mxu0
  %v1471 = vadd.f32 %v1448, %v1470
  %1472 = vdwg.mxu0
  %1473 = vst [vmem:[%s13] sm:$0x3] %v1471
  // Predicated region
  $region54: #{multi_task_forward.1} parent=0 // pred_check
    _
  $region55: #{multi_task_forward.1} parent=0 // pred_check_branch
    %1475 = sbr.rel (0) target = $region57
  $region56: #{multi_task_forward.1} parent=0 // pred_region
    _
  $region57: #{multi_task_forward.1} parent=0 // pred_fallthru
    _
  // Predicated region
  $region58: #{multi_task_forward.1} parent=0 // pred_check
    _
  $region59: #{multi_task_forward.1} parent=0 // pred_check_branch
    %1477 = sbr.rel (0) target = $region61
  $region60: #{multi_task_forward.1} parent=0 // pred_region
    _
  $region61: #{multi_task_forward.1} parent=0 // pred_fallthru
    _

</llo_original>
